<compile_context>
chip_gen: v6e
topology: v6e:2x2x1
jax: 0.10.0
libtpu: 0.0.40
codegen_flags: <defaults>
</compile_context>

<pallas_src>
import jax
import jax.numpy as jnp
from jax.experimental import pallas as pl
from jax.experimental.pallas import tpu as pltpu

HIDDEN = 768        # hard-coded in the PyTorch module (LayerNorm(768), Linear(768,1))
LN_EPS = 1e-5       # torch.nn.LayerNorm default


def _round_up(x, m):
    return ((x + m - 1) // m) * m


def spc_kernel(feats_ref, pw_ref, pb_ref, g_ref, b_ref, cw_ref, cb_ref, out_ref):
    """feats_ref: (C, TB, H) bf16 block; out_ref: (TB, 1) f32 block."""
    C, TB, H = feats_ref.shape

    # --- per-chunk BERT pooler (dense + tanh), fused over all chunks ---
    # One MXU weight push: (C*TB, H) x (H, H) bf16 -> f32 accumulate.
    f = feats_ref[...].reshape(C * TB, H)                       # bf16
    p = jnp.tanh(
        jnp.dot(f, pw_ref[...], preferred_element_type=jnp.float32)
        + pb_ref[...])                                          # (C*TB, H) f32
    p = p.reshape(C, TB, H)

    # Chunk reductions (cheap elementwise across the leading axis).
    s = jnp.sum(p, axis=0)                                      # (TB, H)
    mx = jnp.max(p, axis=0)                                     # (TB, H)

    # --- MaskedGlobalAvgPool1d (faithfully reproduces its quirky denominator:
    #     sum over hidden of the chunk-summed embeds, clamp(min=1)) ---
    denom = jnp.sum(s, axis=1, keepdims=True)                   # (TB, 1)
    avg = s / jnp.maximum(denom, 1.0)

    # --- stack((avg, max), dim=1).sum(dim=1) == avg + max ---
    joined = avg + mx                                           # (TB, H)

    # --- LayerNorm(768), f32 ---
    mean = jnp.mean(joined, axis=1, keepdims=True)
    var = jnp.mean(jnp.square(joined - mean), axis=1, keepdims=True)
    normed = (joined - mean) * jax.lax.rsqrt(var + LN_EPS)
    normed = normed * g_ref[...] + b_ref[...]

    # TODO(synk): nn.Dropout(p=0.1) is identity in eval mode; training-mode
    # dropout not implemented in-kernel.

    # --- cls_layer: Linear(768, 1) as VPU multiply + lane reduction ---
    out_ref[...] = (jnp.sum(normed * cw_ref[...], axis=1, keepdims=True)
                    + cb_ref[0, 0])


def sentence_pair_classifier_forward(input_ids, attention_masks, params,
                                     new_num_chunks=(1,)):
    """input_ids / attention_masks: (batch, num_chunks, chunk_len) int32."""
    B, C, L = input_ids.shape
    c_used = int(max(new_num_chunks))
    H = params["emb"].shape[1]

    # ---------- plain-JAX glue: deterministic BERT-backbone stub ----------
    # TODO(synk): pretrained ALBERT encoder has no in-script equivalent;
    # replaced by embedding lookup + masked token-mean per chunk.
    ids = input_ids[:, :c_used, :]                               # (B, Cu, L)
    mask = attention_masks[:, :c_used, :].astype(jnp.float32)    # (B, Cu, L)
    emb = jnp.take(params["emb"], ids, axis=0)                   # (B, Cu, L, H)
    tok_cnt = jnp.maximum(jnp.sum(mask, axis=-1, keepdims=True), 1.0)  # (B,Cu,1)
    # Contraction form: avoids materializing emb * mask[..., None].
    feats = jnp.einsum("bcl,bclh->bch", mask / tok_cnt, emb)     # (B, Cu, H) f32
    feats = jnp.transpose(feats, (1, 0, 2))                      # (Cu, B, H)

    # ----------------- batch tiling (multiple of 16 for bf16) -------------
    TB = min(128, _round_up(B, 16))
    B_pad = _round_up(B, TB)
    if B_pad != B:
        feats = jnp.pad(feats, ((0, 0), (0, B_pad - B), (0, 0)))
    feats = feats.astype(jnp.bfloat16)                           # halve HBM traffic

    pooler_w = params["pooler_w"].astype(jnp.bfloat16)           # bf16 MXU path
    cls_w_row = params["cls_w"].reshape(1, H)                    # (1, 768)

    # ---------------------- Pallas kernel (hot path) ----------------------
    out = pl.pallas_call(
        spc_kernel,
        out_shape=jax.ShapeDtypeStruct((B_pad, 1), jnp.float32),
        grid=(B_pad // TB,),
        in_specs=[
            pl.BlockSpec((c_used, TB, H), lambda i: (0, i, 0)),  # feats
            pl.BlockSpec((H, H), lambda i: (0, 0)),              # pooler_w
            pl.BlockSpec((1, H), lambda i: (0, 0)),              # pooler_b
            pl.BlockSpec((1, H), lambda i: (0, 0)),              # ln_g
            pl.BlockSpec((1, H), lambda i: (0, 0)),              # ln_b
            pl.BlockSpec((1, H), lambda i: (0, 0)),              # cls_w (row)
            pl.BlockSpec(memory_space=pltpu.MemorySpace.SMEM),   # cls_b scalar
        ],
        out_specs=pl.BlockSpec((TB, 1), lambda i: (i, 0)),
        compiler_params=pltpu.CompilerParams(
            dimension_semantics=("parallel",),
            vmem_limit_bytes=32 * 1024 * 1024),
    )(feats, pooler_w, params["pooler_b"], params["ln_g"], params["ln_b"],
      cls_w_row, params["cls_b"])
    return out[:B]


def reference_forward(input_ids, attention_masks, params, new_num_chunks=(1,)):
    """Pure-JAX reference mirroring the PyTorch forward (for sanity check).

    The pooler matmul uses the same bf16 operands as the kernel (matching the
    PyTorch module's autocast behavior) with f32 accumulation.
    """
    B, C, L = input_ids.shape
    c_used = int(max(new_num_chunks))
    H = params["emb"].shape[1]
    ids = input_ids[:, :c_used, :]
    mask = attention_masks[:, :c_used, :].astype(jnp.float32)
    emb = jnp.take(params["emb"], ids, axis=0)
    tok_cnt = jnp.maximum(jnp.sum(mask, axis=-1, keepdims=True), 1.0)
    feats = jnp.einsum("bcl,bclh->bch", mask / tok_cnt, emb)        # (B,Cu,H)
    pooled = jnp.tanh(
        jnp.dot(feats.astype(jnp.bfloat16).reshape(B * c_used, H),
                params["pooler_w"].astype(jnp.bfloat16),
                preferred_element_type=jnp.float32).reshape(B, c_used, H)
        + params["pooler_b"])                                       # (B,Cu,H)
    s = jnp.sum(pooled, axis=1)                                     # (B,H)
    denom = jnp.sum(s, axis=1, keepdims=True)
    avg = s / jnp.maximum(denom, 1.0)
    mx = jnp.max(pooled, axis=1)
    joined = avg + mx
    mean = jnp.mean(joined, axis=1, keepdims=True)
    var = jnp.mean(jnp.square(joined - mean), axis=1, keepdims=True)
    normed = (joined - mean) * jax.lax.rsqrt(var + LN_EPS)
    normed = normed * params["ln_g"] + params["ln_b"]
    return normed @ params["cls_w"] + params["cls_b"]


def init_params(key, vocab=50, hidden=HIDDEN):
    k0, k1, k2, k3 = jax.random.split(key, 4)
    return {
        "emb": jax.random.normal(k0, (vocab, hidden), jnp.float32) * 0.02,
        "pooler_w": jax.random.normal(k1, (hidden, hidden), jnp.float32) * 0.02,
        "pooler_b": jax.random.normal(k2, (1, hidden), jnp.float32) * 0.02,
        "ln_g": jnp.ones((1, hidden), jnp.float32),
        "ln_b": jnp.zeros((1, hidden), jnp.float32),
        "cls_w": jax.random.normal(k3, (hidden, 1), jnp.float32) * 0.02,
        "cls_b": jnp.zeros((1, 1), jnp.float32),
    }


if __name__ == "__main__":
    key = jax.random.PRNGKey(0)
    k_param, k_ids, k_mask = jax.random.split(key, 3)

    batch, num_chunks, chunk_len, vocab = 2, 3, 8, 50
    params = init_params(k_param, vocab=vocab, hidden=HIDDEN)

    input_ids = jax.random.randint(
        k_ids, (batch, num_chunks, chunk_len), 0, vocab, dtype=jnp.int32)
    attention_masks = jax.random.bernoulli(
        k_mask, 0.8, (batch, num_chunks, chunk_len)).astype(jnp.int32)
    # first token of every chunk is never padded
    attention_masks = attention_masks.at[:, :, 0].set(1)

    new_num_chunks = [num_chunks]

    logits = sentence_pair_classifier_forward(
        input_ids, attention_masks, params, new_num_chunks)
    logits = jax.block_until_ready(logits)

    ref = reference_forward(input_ids, attention_masks, params, new_num_chunks)
    assert logits.shape == (batch, 1)
    assert jnp.allclose(logits, ref, atol=2e-3, rtol=2e-3), (logits, ref)

    print("KERNEL_OK")
</pallas_src>

<mosaic_0001>
module attributes {stable_mosaic.version = 11 : i64} {
  func.func @spc_kernel(%arg0: i32, %arg1: memref<3x16x768xbf16, #tpu.memory_space<vmem>>, %arg2: memref<768x768xbf16, #tpu.memory_space<vmem>>, %arg3: memref<1x768xf32, #tpu.memory_space<vmem>>, %arg4: memref<1x768xf32, #tpu.memory_space<vmem>>, %arg5: memref<1x768xf32, #tpu.memory_space<vmem>>, %arg6: memref<1x768xf32, #tpu.memory_space<vmem>>, %arg7: memref<1x1xf32, #tpu.memory_space<smem>>, %arg8: memref<16x1xf32, #tpu.memory_space<vmem>>) attributes {dimension_semantics = [#tpu.dimension_semantics<parallel>], iteration_bounds = array<i64: 1>, scalar_prefetch = 0 : i64, scratch_operands = 0 : i64, tpu.core_type = #tpu.core_type<tc>, window_params = [{transform_indices = @transform_0, window_bounds = array<i64: 3, 16, 768>}, {pipeline_mode = #tpu.pipeline_mode<synchronous>, transform_indices = @transform_1, window_bounds = array<i64: 768, 768>}, {pipeline_mode = #tpu.pipeline_mode<synchronous>, transform_indices = @transform_2, window_bounds = array<i64: 1, 768>}, {pipeline_mode = #tpu.pipeline_mode<synchronous>, transform_indices = @transform_3, window_bounds = array<i64: 1, 768>}, {pipeline_mode = #tpu.pipeline_mode<synchronous>, transform_indices = @transform_4, window_bounds = array<i64: 1, 768>}, {pipeline_mode = #tpu.pipeline_mode<synchronous>, transform_indices = @transform_5, window_bounds = array<i64: 1, 768>}, {transform_indices = @transform_6, window_bounds = array<i64: 1, 1>}, {transform_indices = @transform_7, window_bounds = array<i64: 16, 1>}]} {
    %c0 = arith.constant 0 : index
    %c0_0 = arith.constant 0 : index
    %c0_1 = arith.constant 0 : index
    %0 = vector.load %arg1[%c0, %c0_0, %c0_1] : memref<3x16x768xbf16, #tpu.memory_space<vmem>>, vector<3x16x768xbf16>
    %1 = vector.shape_cast %0 : vector<3x16x768xbf16> to vector<48x768xbf16>
    %c0_2 = arith.constant 0 : index
    %c0_3 = arith.constant 0 : index
    %2 = vector.load %arg2[%c0_2, %c0_3] : memref<768x768xbf16, #tpu.memory_space<vmem>>, vector<768x768xbf16>
    %cst = arith.constant dense<0.000000e+00> : vector<48x768xf32>
    %3 = tpu.matmul %1, %2, %cst {dimension_numbers = #tpu.dot_dimension_numbers<[1], [0], [0], [1], [0, 0, 1, 1], [], []>} : vector<48x768xbf16>, vector<768x768xbf16>, vector<48x768xf32> -> vector<48x768xf32>
    %c0_4 = arith.constant 0 : index
    %c0_5 = arith.constant 0 : index
    %4 = vector.load %arg3[%c0_4, %c0_5] : memref<1x768xf32, #tpu.memory_space<vmem>>, vector<1x768xf32>
    %5 = vector.broadcast %4 : vector<1x768xf32> to vector<48x768xf32>
    %6 = arith.addf %3, %5 : vector<48x768xf32>
    %7 = math.tanh %6 : vector<48x768xf32>
    %8 = vector.shape_cast %7 : vector<48x768xf32> to vector<3x16x768xf32>
    %cst_6 = arith.constant dense<0.000000e+00> : vector<16x768xf32>
    %9 = vector.multi_reduction <add>, %8, %cst_6 [0] : vector<3x16x768xf32> to vector<16x768xf32>
    %cst_7 = arith.constant dense<0xFF800000> : vector<16x768xf32>
    %10 = vector.multi_reduction <maximumf>, %8, %cst_7 [0] : vector<3x16x768xf32> to vector<16x768xf32>
    %cst_8 = arith.constant dense<0.000000e+00> : vector<16xf32>
    %11 = vector.multi_reduction <add>, %9, %cst_8 [1] : vector<16x768xf32> to vector<16xf32>
    %12 = vector.shape_cast %11 : vector<16xf32> to vector<16x1xf32>
    %cst_9 = arith.constant 1.000000e+00 : f32
    %13 = vector.broadcast %cst_9 : f32 to vector<16x1xf32>
    %14 = arith.maximumf %12, %13 : vector<16x1xf32>
    %15 = vector.broadcast %14 : vector<16x1xf32> to vector<16x768xf32>
    %16 = arith.divf %9, %15 : vector<16x768xf32>
    %17 = arith.addf %16, %10 : vector<16x768xf32>
    %cst_10 = arith.constant dense<0.000000e+00> : vector<16xf32>
    %18 = vector.multi_reduction <add>, %17, %cst_10 [1] : vector<16x768xf32> to vector<16xf32>
    %19 = vector.shape_cast %18 : vector<16xf32> to vector<16x1xf32>
    %cst_11 = arith.constant 7.680000e+02 : f32
    %20 = vector.broadcast %cst_11 : f32 to vector<16x1xf32>
    %21 = arith.divf %19, %20 : vector<16x1xf32>
    %22 = vector.broadcast %21 : vector<16x1xf32> to vector<16x768xf32>
    %23 = arith.subf %17, %22 : vector<16x768xf32>
    %24 = arith.mulf %23, %23 : vector<16x768xf32>
    %cst_12 = arith.constant dense<0.000000e+00> : vector<16xf32>
    %25 = vector.multi_reduction <add>, %24, %cst_12 [1] : vector<16x768xf32> to vector<16xf32>
    %26 = vector.shape_cast %25 : vector<16xf32> to vector<16x1xf32>
    %cst_13 = arith.constant 7.680000e+02 : f32
    %27 = vector.broadcast %cst_13 : f32 to vector<16x1xf32>
    %28 = arith.divf %26, %27 : vector<16x1xf32>
    %29 = vector.broadcast %21 : vector<16x1xf32> to vector<16x768xf32>
    %30 = arith.subf %17, %29 : vector<16x768xf32>
    %cst_14 = arith.constant 9.99999974E-6 : f32
    %31 = vector.broadcast %cst_14 : f32 to vector<16x1xf32>
    %32 = arith.addf %28, %31 : vector<16x1xf32>
    %33 = math.rsqrt %32 : vector<16x1xf32>
    %34 = vector.broadcast %33 : vector<16x1xf32> to vector<16x768xf32>
    %35 = arith.mulf %30, %34 : vector<16x768xf32>
    %c0_15 = arith.constant 0 : index
    %c0_16 = arith.constant 0 : index
    %36 = vector.load %arg4[%c0_15, %c0_16] : memref<1x768xf32, #tpu.memory_space<vmem>>, vector<1x768xf32>
    %37 = vector.broadcast %36 : vector<1x768xf32> to vector<16x768xf32>
    %38 = arith.mulf %35, %37 : vector<16x768xf32>
    %c0_17 = arith.constant 0 : index
    %c0_18 = arith.constant 0 : index
    %39 = vector.load %arg5[%c0_17, %c0_18] : memref<1x768xf32, #tpu.memory_space<vmem>>, vector<1x768xf32>
    %40 = vector.broadcast %39 : vector<1x768xf32> to vector<16x768xf32>
    %41 = arith.addf %38, %40 : vector<16x768xf32>
    %c0_19 = arith.constant 0 : index
    %c0_20 = arith.constant 0 : index
    %42 = vector.load %arg6[%c0_19, %c0_20] : memref<1x768xf32, #tpu.memory_space<vmem>>, vector<1x768xf32>
    %43 = vector.broadcast %42 : vector<1x768xf32> to vector<16x768xf32>
    %44 = arith.mulf %41, %43 : vector<16x768xf32>
    %cst_21 = arith.constant dense<0.000000e+00> : vector<16xf32>
    %45 = vector.multi_reduction <add>, %44, %cst_21 [1] : vector<16x768xf32> to vector<16xf32>
    %46 = vector.shape_cast %45 : vector<16xf32> to vector<16x1xf32>
    %c0_22 = arith.constant 0 : index
    %c0_23 = arith.constant 0 : index
    %47 = memref.load %arg7[%c0_22, %c0_23] : memref<1x1xf32, #tpu.memory_space<smem>>
    %48 = vector.broadcast %47 : f32 to vector<16x1xf32>
    %49 = arith.addf %46, %48 : vector<16x1xf32>
    %c0_24 = arith.constant 0 : index
    %c0_25 = arith.constant 0 : index
    %50 = vector.load %arg8[%c0_24, %c0_25] : memref<16x1xf32, #tpu.memory_space<vmem>>, vector<16x1xf32>
    tpu.vector_store %arg8[%c0_24, %c0_25], %49 {strides = array<i32>} : memref<16x1xf32, #tpu.memory_space<vmem>>, vector<16x1xf32>,
    return
  }
  func.func @transform_0(%arg0: i32) -> (i32, i32, i32) {
    %c0_i32 = arith.constant 0 : i32
    %c0_i32_0 = arith.constant 0 : i32
    %c0_i32_1 = arith.constant 0 : i32
    return %c0_i32, %arg0, %c0_i32_0 : i32, i32, i32
  }
  func.func @transform_1(%arg0: i32) -> (i32, i32) {
    %c0_i32 = arith.constant 0 : i32
    %c0_i32_0 = arith.constant 0 : i32
    %c0_i32_1 = arith.constant 0 : i32
    return %c0_i32, %c0_i32_0 : i32, i32
  }
  func.func @transform_2(%arg0: i32) -> (i32, i32) {
    %c0_i32 = arith.constant 0 : i32
    %c0_i32_0 = arith.constant 0 : i32
    %c0_i32_1 = arith.constant 0 : i32
    return %c0_i32, %c0_i32_0 : i32, i32
  }
  func.func @transform_3(%arg0: i32) -> (i32, i32) {
    %c0_i32 = arith.constant 0 : i32
    %c0_i32_0 = arith.constant 0 : i32
    %c0_i32_1 = arith.constant 0 : i32
    return %c0_i32, %c0_i32_0 : i32, i32
  }
  func.func @transform_4(%arg0: i32) -> (i32, i32) {
    %c0_i32 = arith.constant 0 : i32
    %c0_i32_0 = arith.constant 0 : i32
    %c0_i32_1 = arith.constant 0 : i32
    return %c0_i32, %c0_i32_0 : i32, i32
  }
  func.func @transform_5(%arg0: i32) -> (i32, i32) {
    %c0_i32 = arith.constant 0 : i32
    %c0_i32_0 = arith.constant 0 : i32
    %c0_i32_1 = arith.constant 0 : i32
    return %c0_i32, %c0_i32_0 : i32, i32
  }
  func.func @transform_6(%arg0: i32) -> (i32, i32) {
    %c0_i32 = arith.constant 0 : i32
    %c0_i32_0 = arith.constant 0 : i32
    %c0_i32_1 = arith.constant 0 : i32
    return %c0_i32, %c0_i32_0 : i32, i32
  }
  func.func @transform_7(%arg0: i32) -> (i32, i32) {
    %c0_i32 = arith.constant 0 : i32
    %c0_i32_0 = arith.constant 0 : i32
    return %arg0, %c0_i32 : i32, i32
  }
}

</mosaic_0001>

<llo_original>
// kernel: tpu_custom_call.1
$region0: #{tpu_custom_call.1}
  #allocation0 [shape = 'u32[]', space=smem, size = 0x4, offset = 0x4, fixed_abs, tag = 'smem constant byte address 0x4 - core index']
  #allocation1 [shape = 'u32[144,128]{1,0:T(1,128)}', space=vmem, size = 0x12000, scoped, tag = 'internal scratch']
  #allocation2 [shape = 'f32[1,1]{1,0:T(1,128)S(6)}', space=smem, size = 0x200, scoped, tag = 'scoped memory for tpu_custom_call.1']
  %s0 = inlined_call_operand.hbm [shape: bf16[3,16,768], index: 0, kind: input, shape index: {}]
  %s1 = inlined_call_operand.hbm [shape: bf16[768,768], index: 1, kind: input, shape index: {}]
  %s2 = inlined_call_operand.hbm [shape: f32[1,768], index: 2, kind: input, shape index: {}]
  %s3 = inlined_call_operand.hbm [shape: f32[1,768], index: 3, kind: input, shape index: {}]
  %s4 = inlined_call_operand.hbm [shape: f32[1,768], index: 4, kind: input, shape index: {}]
  %s5 = inlined_call_operand.hbm [shape: f32[1,768], index: 5, kind: input, shape index: {}]
  %s6 = inlined_call_operand.<no memory space> [shape: f32[1,1], index: 6, kind: input, shape index: {}]
  %s7 = inlined_call_operand.vmem [shape: f32[16,1], index: 7, kind: output, shape index: {}]
  %s8 = sld [smem:[#allocation0]]
  $region62: #{tpu_custom_call.1} parent=0
    _
  %s10 = ssub.s32 1, %s8
  %s11 = scalar_select 0, %s10, %s8
  %12 = sst [smem:[#allocation2]] %s6
  $region1: #{tpu_custom_call.1} parent=0
    #allocation3 [shape = 'u8[73728]{0}', space=vmem, size = 0x12000, scoped, tag = 'input window, operand 0, single buffered']
    #allocation4 [shape = 's32[1]{0}', space=sflag, size = 0x4, scoped, tag = 'scoped memory for tpu_custom_call.1']
    #allocation5 [shape = 'u8[1179648]{0}', space=vmem, size = 0x120000, scoped, tag = 'input window, operand 1, single buffered']
    #allocation6 [shape = 's32[1]{0}', space=sflag, size = 0x4, scoped, tag = 'scoped memory for tpu_custom_call.1']
    #allocation7 [shape = 'u8[3072]{0}', space=vmem, size = 0xc00, scoped, tag = 'input window, operand 2, single buffered']
    #allocation8 [shape = 'u8[3072]{0}', space=vmem, size = 0xc00, scoped, tag = 'input window, operand 3, single buffered']
    #allocation9 [shape = 's32[1]{0}', space=sflag, size = 0x4, scoped, tag = 'scoped memory for tpu_custom_call.1']
    #allocation10 [shape = 'u8[3072]{0}', space=vmem, size = 0xc00, scoped, tag = 'input window, operand 4, single buffered']
    #allocation11 [shape = 'u8[3072]{0}', space=vmem, size = 0xc00, scoped, tag = 'input window, operand 5, single buffered']
    #allocation12 [shape = 's32[1]{0}', space=sflag, size = 0x4, scoped, tag = 'scoped memory for tpu_custom_call.1']
    %13 = vsyncpa [#allocation4], 0
    %14 = vsyncpa [#allocation6], 0
    %15 = vsyncpa [#allocation9], 0
    %16 = vsyncpa [#allocation12], 0
    // Predicated region
    $region2: #{tpu_custom_call.1} parent=1 // pred_check
      _
    $region3: #{tpu_custom_call.1} parent=1 // pred_check_branch
      %18 = sbr.rel (0) target = $region5
    $region4: #{tpu_custom_call.1} parent=1 // pred_region
      %s20 = ssub.s32 2304, 2304
      %21 = vsyncadd [#allocation4], %s20
      %s22 = sshll.u32 [#allocation3], 4
      %s23 = int_to_ptr.vmem [resolvable:$true] %s22
      %28 = dma.hbm_to_vmem [thread:$0]  %s0, 2304, %s23, [#allocation4], 384, 384, 24
    $region5: #{tpu_custom_call.1} parent=1 // pred_fallthru
      _
    // Predicated region
    $region6: #{tpu_custom_call.1} parent=1 // pred_check
      _
    $region7: #{tpu_custom_call.1} parent=1 // pred_check_branch
      %30 = sbr.rel (0) target = $region9
    $region8: #{tpu_custom_call.1} parent=1 // pred_region
      %s32 = ssub.s32 36864, 36864
      %33 = vsyncadd [#allocation6], %s32
      %s34 = sshll.u32 [#allocation5], 4
      %s35 = int_to_ptr.vmem [resolvable:$true] %s34
      %40 = dma.hbm_to_vmem [thread:$0]  %s1, 36864, %s35, [#allocation6], 384, 384, 24
    $region9: #{tpu_custom_call.1} parent=1 // pred_fallthru
      _
    // Predicated region
    $region10: #{tpu_custom_call.1} parent=1 // pred_check
      _
    $region11: #{tpu_custom_call.1} parent=1 // pred_check_branch
      %42 = sbr.rel (0) target = $region13
    $region12: #{tpu_custom_call.1} parent=1 // pred_region
      %s44 = ssub.s32 96, 96
      %45 = vsyncadd [#allocation6], %s44
      %s47 = sshll.u32 [#allocation7], 4
      %s48 = int_to_ptr.vmem [resolvable:$true] %s47
      %50 = dma.hbm_to_vmem [thread:$0]  %s2, 96, %s48, [#allocation6]
    $region13: #{tpu_custom_call.1} parent=1 // pred_fallthru
      _
    // Predicated region
    $region14: #{tpu_custom_call.1} parent=1 // pred_check
      _
    $region15: #{tpu_custom_call.1} parent=1 // pred_check_branch
      %52 = sbr.rel (0) target = $region17
    $region16: #{tpu_custom_call.1} parent=1 // pred_region
      %s54 = ssub.s32 96, 96
      %55 = vsyncadd [#allocation9], %s54
      %s57 = sshll.u32 [#allocation8], 4
      %s58 = int_to_ptr.vmem [resolvable:$true] %s57
      %60 = dma.hbm_to_vmem [thread:$0]  %s3, 96, %s58, [#allocation9]
    $region17: #{tpu_custom_call.1} parent=1 // pred_fallthru
      _
    // Predicated region
    $region18: #{tpu_custom_call.1} parent=1 // pred_check
      _
    $region19: #{tpu_custom_call.1} parent=1 // pred_check_branch
      %62 = sbr.rel (0) target = $region21
    $region20: #{tpu_custom_call.1} parent=1 // pred_region
      %s64 = ssub.s32 96, 96
      %65 = vsyncadd [#allocation9], %s64
      %s67 = sshll.u32 [#allocation10], 4
      %s68 = int_to_ptr.vmem [resolvable:$true] %s67
      %70 = dma.hbm_to_vmem [thread:$0]  %s4, 96, %s68, [#allocation9]
    $region21: #{tpu_custom_call.1} parent=1 // pred_fallthru
      _
    // Predicated region
    $region22: #{tpu_custom_call.1} parent=1 // pred_check
      _
    $region23: #{tpu_custom_call.1} parent=1 // pred_check_branch
      %72 = sbr.rel (0) target = $region25
    $region24: #{tpu_custom_call.1} parent=1 // pred_region
      %s74 = ssub.s32 96, 96
      %75 = vsyncadd [#allocation12], %s74
      %s77 = sshll.u32 [#allocation11], 4
      %s78 = int_to_ptr.vmem [resolvable:$true] %s77
      %80 = dma.hbm_to_vmem [thread:$0]  %s5, 96, %s78, [#allocation12]
    $region25: #{tpu_custom_call.1} parent=1 // pred_fallthru
      _
    // Predicated region
    $region26: #{tpu_custom_call.1} parent=1 // pred_check
      _
    $region27: #{tpu_custom_call.1} parent=1 // pred_check_branch
      %82 = sbr.rel (0) target = $region29
    $region28: #{tpu_custom_call.1} parent=1 // pred_region
      _
    $region29: #{tpu_custom_call.1} parent=1 // pred_fallthru
      _
    // Predicated region
    $region30: #{tpu_custom_call.1} parent=1 // pred_check
      _
    $region31: #{tpu_custom_call.1} parent=1 // pred_check_branch
      %84 = sbr.rel (0) target = $region33
    $region32: #{tpu_custom_call.1} parent=1 // pred_region
      %85 = dma.done [#allocation4], 2304
    $region33: #{tpu_custom_call.1} parent=1 // pred_fallthru
      _
    // Predicated region
    $region34: #{tpu_custom_call.1} parent=1 // pred_check
      _
    $region35: #{tpu_custom_call.1} parent=1 // pred_check_branch
      %87 = sbr.rel (0) target = $region37
    $region36: #{tpu_custom_call.1} parent=1 // pred_region
      %88 = dma.done [#allocation6], 36864
    $region37: #{tpu_custom_call.1} parent=1 // pred_fallthru
      _
    // Predicated region
    $region38: #{tpu_custom_call.1} parent=1 // pred_check
      _
    $region39: #{tpu_custom_call.1} parent=1 // pred_check_branch
      %90 = sbr.rel (0) target = $region41
    $region40: #{tpu_custom_call.1} parent=1 // pred_region
      %91 = dma.done [#allocation6], 96
    $region41: #{tpu_custom_call.1} parent=1 // pred_fallthru
      _
    // Predicated region
    $region42: #{tpu_custom_call.1} parent=1 // pred_check
      _
    $region43: #{tpu_custom_call.1} parent=1 // pred_check_branch
      %93 = sbr.rel (0) target = $region45
    $region44: #{tpu_custom_call.1} parent=1 // pred_region
      %94 = dma.done [#allocation9], 96
    $region45: #{tpu_custom_call.1} parent=1 // pred_fallthru
      _
    // Predicated region
    $region46: #{tpu_custom_call.1} parent=1 // pred_check
      _
    $region47: #{tpu_custom_call.1} parent=1 // pred_check_branch
      %96 = sbr.rel (0) target = $region49
    $region48: #{tpu_custom_call.1} parent=1 // pred_region
      %97 = dma.done [#allocation9], 96
    $region49: #{tpu_custom_call.1} parent=1 // pred_fallthru
      _
    // Predicated region
    $region50: #{tpu_custom_call.1} parent=1 // pred_check
      _
    $region51: #{tpu_custom_call.1} parent=1 // pred_check_branch
      %99 = sbr.rel (0) target = $region53
    $region52: #{tpu_custom_call.1} parent=1 // pred_region
      %100 = dma.done [#allocation12], 96
    $region53: #{tpu_custom_call.1} parent=1 // pred_fallthru
      _
    %v101 = vld [vmem:[#allocation3] sm:$0xff]
    %v102 = vld [vmem:[#allocation3 + $0x8] sm:$0xff]
    %v103 = vld [vmem:[#allocation3 + $0x10] sm:$0xff]
    %v104 = vld [vmem:[#allocation3 + $0x18] sm:$0xff]
    %v105 = vld [vmem:[#allocation3 + $0x20] sm:$0xff]
    %v106 = vld [vmem:[#allocation3 + $0x28] sm:$0xff]
    %v107 = vld [vmem:[#allocation3 + $0x30] sm:$0xff]
    %v108 = vld [vmem:[#allocation3 + $0x38] sm:$0xff]
    %v109 = vld [vmem:[#allocation3 + $0x40] sm:$0xff]
    %v110 = vld [vmem:[#allocation3 + $0x48] sm:$0xff]
    %v111 = vld [vmem:[#allocation3 + $0x50] sm:$0xff]
    %v112 = vld [vmem:[#allocation3 + $0x58] sm:$0xff]
    %v113 = vld [vmem:[#allocation3 + $0x60] sm:$0xff]
    %v114 = vld [vmem:[#allocation3 + $0x68] sm:$0xff]
    %v115 = vld [vmem:[#allocation3 + $0x70] sm:$0xff]
    %v116 = vld [vmem:[#allocation3 + $0x78] sm:$0xff]
    %v117 = vld [vmem:[#allocation3 + $0x80] sm:$0xff]
    %v118 = vld [vmem:[#allocation3 + $0x88] sm:$0xff]
    %v119 = vld [vmem:[#allocation5] sm:$0xff]
    %v120 = vld [vmem:[#allocation5 + $0x8] sm:$0xff]
    %v121 = vld [vmem:[#allocation5 + $0x10] sm:$0xff]
    %v122 = vld [vmem:[#allocation5 + $0x18] sm:$0xff]
    %v123 = vld [vmem:[#allocation5 + $0x20] sm:$0xff]
    %v124 = vld [vmem:[#allocation5 + $0x28] sm:$0xff]
    %v125 = vld [vmem:[#allocation5 + $0x30] sm:$0xff]
    %v126 = vld [vmem:[#allocation5 + $0x38] sm:$0xff]
    %v127 = vld [vmem:[#allocation5 + $0x40] sm:$0xff]
    %v128 = vld [vmem:[#allocation5 + $0x48] sm:$0xff]
    %v129 = vld [vmem:[#allocation5 + $0x50] sm:$0xff]
    %v130 = vld [vmem:[#allocation5 + $0x58] sm:$0xff]
    %v131 = vld [vmem:[#allocation5 + $0x60] sm:$0xff]
    %v132 = vld [vmem:[#allocation5 + $0x68] sm:$0xff]
    %v133 = vld [vmem:[#allocation5 + $0x70] sm:$0xff]
    %v134 = vld [vmem:[#allocation5 + $0x78] sm:$0xff]
    %v135 = vld [vmem:[#allocation5 + $0x80] sm:$0xff]
    %v136 = vld [vmem:[#allocation5 + $0x88] sm:$0xff]
    %v137 = vld [vmem:[#allocation5 + $0x90] sm:$0xff]
    %v138 = vld [vmem:[#allocation5 + $0x98] sm:$0xff]
    %v139 = vld [vmem:[#allocation5 + $0xa0] sm:$0xff]
    %v140 = vld [vmem:[#allocation5 + $0xa8] sm:$0xff]
    %v141 = vld [vmem:[#allocation5 + $0xb0] sm:$0xff]
    %v142 = vld [vmem:[#allocation5 + $0xb8] sm:$0xff]
    %v143 = vld [vmem:[#allocation5 + $0xc0] sm:$0xff]
    %v144 = vld [vmem:[#allocation5 + $0xc8] sm:$0xff]
    %v145 = vld [vmem:[#allocation5 + $0xd0] sm:$0xff]
    %v146 = vld [vmem:[#allocation5 + $0xd8] sm:$0xff]
    %v147 = vld [vmem:[#allocation5 + $0xe0] sm:$0xff]
    %v148 = vld [vmem:[#allocation5 + $0xe8] sm:$0xff]
    %v149 = vld [vmem:[#allocation5 + $0xf0] sm:$0xff]
    %v150 = vld [vmem:[#allocation5 + $0xf8] sm:$0xff]
    %v151 = vld [vmem:[#allocation5 + $0x100] sm:$0xff]
    %v152 = vld [vmem:[#allocation5 + $0x108] sm:$0xff]
    %v153 = vld [vmem:[#allocation5 + $0x110] sm:$0xff]
    %v154 = vld [vmem:[#allocation5 + $0x118] sm:$0xff]
    %v155 = vld [vmem:[#allocation5 + $0x120] sm:$0xff]
    %v156 = vld [vmem:[#allocation5 + $0x128] sm:$0xff]
    %v157 = vld [vmem:[#allocation5 + $0x130] sm:$0xff]
    %v158 = vld [vmem:[#allocation5 + $0x138] sm:$0xff]
    %v159 = vld [vmem:[#allocation5 + $0x140] sm:$0xff]
    %v160 = vld [vmem:[#allocation5 + $0x148] sm:$0xff]
    %v161 = vld [vmem:[#allocation5 + $0x150] sm:$0xff]
    %v162 = vld [vmem:[#allocation5 + $0x158] sm:$0xff]
    %v163 = vld [vmem:[#allocation5 + $0x160] sm:$0xff]
    %v164 = vld [vmem:[#allocation5 + $0x168] sm:$0xff]
    %v165 = vld [vmem:[#allocation5 + $0x170] sm:$0xff]
    %v166 = vld [vmem:[#allocation5 + $0x178] sm:$0xff]
    %v167 = vld [vmem:[#allocation5 + $0x180] sm:$0xff]
    %v168 = vld [vmem:[#allocation5 + $0x188] sm:$0xff]
    %v169 = vld [vmem:[#allocation5 + $0x190] sm:$0xff]
    %v170 = vld [vmem:[#allocation5 + $0x198] sm:$0xff]
    %v171 = vld [vmem:[#allocation5 + $0x1a0] sm:$0xff]
    %v172 = vld [vmem:[#allocation5 + $0x1a8] sm:$0xff]
    %v173 = vld [vmem:[#allocation5 + $0x1b0] sm:$0xff]
    %v174 = vld [vmem:[#allocation5 + $0x1b8] sm:$0xff]
    %v175 = vld [vmem:[#allocation5 + $0x1c0] sm:$0xff]
    %v176 = vld [vmem:[#allocation5 + $0x1c8] sm:$0xff]
    %v177 = vld [vmem:[#allocation5 + $0x1d0] sm:$0xff]
    %v178 = vld [vmem:[#allocation5 + $0x1d8] sm:$0xff]
    %v179 = vld [vmem:[#allocation5 + $0x1e0] sm:$0xff]
    %v180 = vld [vmem:[#allocation5 + $0x1e8] sm:$0xff]
    %v181 = vld [vmem:[#allocation5 + $0x1f0] sm:$0xff]
    %v182 = vld [vmem:[#allocation5 + $0x1f8] sm:$0xff]
    %v183 = vld [vmem:[#allocation5 + $0x200] sm:$0xff]
    %v184 = vld [vmem:[#allocation5 + $0x208] sm:$0xff]
    %v185 = vld [vmem:[#allocation5 + $0x210] sm:$0xff]
    %v186 = vld [vmem:[#allocation5 + $0x218] sm:$0xff]
    %v187 = vld [vmem:[#allocation5 + $0x220] sm:$0xff]
    %v188 = vld [vmem:[#allocation5 + $0x228] sm:$0xff]
    %v189 = vld [vmem:[#allocation5 + $0x230] sm:$0xff]
    %v190 = vld [vmem:[#allocation5 + $0x238] sm:$0xff]
    %v191 = vld [vmem:[#allocation5 + $0x240] sm:$0xff]
    %v192 = vld [vmem:[#allocation5 + $0x248] sm:$0xff]
    %v193 = vld [vmem:[#allocation5 + $0x250] sm:$0xff]
    %v194 = vld [vmem:[#allocation5 + $0x258] sm:$0xff]
    %v195 = vld [vmem:[#allocation5 + $0x260] sm:$0xff]
    %v196 = vld [vmem:[#allocation5 + $0x268] sm:$0xff]
    %v197 = vld [vmem:[#allocation5 + $0x270] sm:$0xff]
    %v198 = vld [vmem:[#allocation5 + $0x278] sm:$0xff]
    %v199 = vld [vmem:[#allocation5 + $0x280] sm:$0xff]
    %v200 = vld [vmem:[#allocation5 + $0x288] sm:$0xff]
    %v201 = vld [vmem:[#allocation5 + $0x290] sm:$0xff]
    %v202 = vld [vmem:[#allocation5 + $0x298] sm:$0xff]
    %v203 = vld [vmem:[#allocation5 + $0x2a0] sm:$0xff]
    %v204 = vld [vmem:[#allocation5 + $0x2a8] sm:$0xff]
    %v205 = vld [vmem:[#allocation5 + $0x2b0] sm:$0xff]
    %v206 = vld [vmem:[#allocation5 + $0x2b8] sm:$0xff]
    %v207 = vld [vmem:[#allocation5 + $0x2c0] sm:$0xff]
    %v208 = vld [vmem:[#allocation5 + $0x2c8] sm:$0xff]
    %v209 = vld [vmem:[#allocation5 + $0x2d0] sm:$0xff]
    %v210 = vld [vmem:[#allocation5 + $0x2d8] sm:$0xff]
    %v211 = vld [vmem:[#allocation5 + $0x2e0] sm:$0xff]
    %v212 = vld [vmem:[#allocation5 + $0x2e8] sm:$0xff]
    %v213 = vld [vmem:[#allocation5 + $0x2f0] sm:$0xff]
    %v214 = vld [vmem:[#allocation5 + $0x2f8] sm:$0xff]
    %v215 = vld [vmem:[#allocation5 + $0x300] sm:$0xff]
    %v216 = vld [vmem:[#allocation5 + $0x308] sm:$0xff]
    %v217 = vld [vmem:[#allocation5 + $0x310] sm:$0xff]
    %v218 = vld [vmem:[#allocation5 + $0x318] sm:$0xff]
    %v219 = vld [vmem:[#allocation5 + $0x320] sm:$0xff]
    %v220 = vld [vmem:[#allocation5 + $0x328] sm:$0xff]
    %v221 = vld [vmem:[#allocation5 + $0x330] sm:$0xff]
    %v222 = vld [vmem:[#allocation5 + $0x338] sm:$0xff]
    %v223 = vld [vmem:[#allocation5 + $0x340] sm:$0xff]
    %v224 = vld [vmem:[#allocation5 + $0x348] sm:$0xff]
    %v225 = vld [vmem:[#allocation5 + $0x350] sm:$0xff]
    %v226 = vld [vmem:[#allocation5 + $0x358] sm:$0xff]
    %v227 = vld [vmem:[#allocation5 + $0x360] sm:$0xff]
    %v228 = vld [vmem:[#allocation5 + $0x368] sm:$0xff]
    %v229 = vld [vmem:[#allocation5 + $0x370] sm:$0xff]
    %v230 = vld [vmem:[#allocation5 + $0x378] sm:$0xff]
    %v231 = vld [vmem:[#allocation5 + $0x380] sm:$0xff]
    %v232 = vld [vmem:[#allocation5 + $0x388] sm:$0xff]
    %v233 = vld [vmem:[#allocation5 + $0x390] sm:$0xff]
    %v234 = vld [vmem:[#allocation5 + $0x398] sm:$0xff]
    %v235 = vld [vmem:[#allocation5 + $0x3a0] sm:$0xff]
    %v236 = vld [vmem:[#allocation5 + $0x3a8] sm:$0xff]
    %v237 = vld [vmem:[#allocation5 + $0x3b0] sm:$0xff]
    %v238 = vld [vmem:[#allocation5 + $0x3b8] sm:$0xff]
    %v239 = vld [vmem:[#allocation5 + $0x3c0] sm:$0xff]
    %v240 = vld [vmem:[#allocation5 + $0x3c8] sm:$0xff]
    %v241 = vld [vmem:[#allocation5 + $0x3d0] sm:$0xff]
    %v242 = vld [vmem:[#allocation5 + $0x3d8] sm:$0xff]
    %v243 = vld [vmem:[#allocation5 + $0x3e0] sm:$0xff]
    %v244 = vld [vmem:[#allocation5 + $0x3e8] sm:$0xff]
    %v245 = vld [vmem:[#allocation5 + $0x3f0] sm:$0xff]
    %v246 = vld [vmem:[#allocation5 + $0x3f8] sm:$0xff]
    %v247 = vld [vmem:[#allocation5 + $0x400] sm:$0xff]
    %v248 = vld [vmem:[#allocation5 + $0x408] sm:$0xff]
    %v249 = vld [vmem:[#allocation5 + $0x410] sm:$0xff]
    %v250 = vld [vmem:[#allocation5 + $0x418] sm:$0xff]
    %v251 = vld [vmem:[#allocation5 + $0x420] sm:$0xff]
    %v252 = vld [vmem:[#allocation5 + $0x428] sm:$0xff]
    %v253 = vld [vmem:[#allocation5 + $0x430] sm:$0xff]
    %v254 = vld [vmem:[#allocation5 + $0x438] sm:$0xff]
    %v255 = vld [vmem:[#allocation5 + $0x440] sm:$0xff]
    %v256 = vld [vmem:[#allocation5 + $0x448] sm:$0xff]
    %v257 = vld [vmem:[#allocation5 + $0x450] sm:$0xff]
    %v258 = vld [vmem:[#allocation5 + $0x458] sm:$0xff]
    %v259 = vld [vmem:[#allocation5 + $0x460] sm:$0xff]
    %v260 = vld [vmem:[#allocation5 + $0x468] sm:$0xff]
    %v261 = vld [vmem:[#allocation5 + $0x470] sm:$0xff]
    %v262 = vld [vmem:[#allocation5 + $0x478] sm:$0xff]
    %v263 = vld [vmem:[#allocation5 + $0x480] sm:$0xff]
    %v264 = vld [vmem:[#allocation5 + $0x488] sm:$0xff]
    %v265 = vld [vmem:[#allocation5 + $0x490] sm:$0xff]
    %v266 = vld [vmem:[#allocation5 + $0x498] sm:$0xff]
    %v267 = vld [vmem:[#allocation5 + $0x4a0] sm:$0xff]
    %v268 = vld [vmem:[#allocation5 + $0x4a8] sm:$0xff]
    %v269 = vld [vmem:[#allocation5 + $0x4b0] sm:$0xff]
    %v270 = vld [vmem:[#allocation5 + $0x4b8] sm:$0xff]
    %v271 = vld [vmem:[#allocation5 + $0x4c0] sm:$0xff]
    %v272 = vld [vmem:[#allocation5 + $0x4c8] sm:$0xff]
    %v273 = vld [vmem:[#allocation5 + $0x4d0] sm:$0xff]
    %v274 = vld [vmem:[#allocation5 + $0x4d8] sm:$0xff]
    %v275 = vld [vmem:[#allocation5 + $0x4e0] sm:$0xff]
    %v276 = vld [vmem:[#allocation5 + $0x4e8] sm:$0xff]
    %v277 = vld [vmem:[#allocation5 + $0x4f0] sm:$0xff]
    %v278 = vld [vmem:[#allocation5 + $0x4f8] sm:$0xff]
    %v279 = vld [vmem:[#allocation5 + $0x500] sm:$0xff]
    %v280 = vld [vmem:[#allocation5 + $0x508] sm:$0xff]
    %v281 = vld [vmem:[#allocation5 + $0x510] sm:$0xff]
    %v282 = vld [vmem:[#allocation5 + $0x518] sm:$0xff]
    %v283 = vld [vmem:[#allocation5 + $0x520] sm:$0xff]
    %v284 = vld [vmem:[#allocation5 + $0x528] sm:$0xff]
    %v285 = vld [vmem:[#allocation5 + $0x530] sm:$0xff]
    %v286 = vld [vmem:[#allocation5 + $0x538] sm:$0xff]
    %v287 = vld [vmem:[#allocation5 + $0x540] sm:$0xff]
    %v288 = vld [vmem:[#allocation5 + $0x548] sm:$0xff]
    %v289 = vld [vmem:[#allocation5 + $0x550] sm:$0xff]
    %v290 = vld [vmem:[#allocation5 + $0x558] sm:$0xff]
    %v291 = vld [vmem:[#allocation5 + $0x560] sm:$0xff]
    %v292 = vld [vmem:[#allocation5 + $0x568] sm:$0xff]
    %v293 = vld [vmem:[#allocation5 + $0x570] sm:$0xff]
    %v294 = vld [vmem:[#allocation5 + $0x578] sm:$0xff]
    %v295 = vld [vmem:[#allocation5 + $0x580] sm:$0xff]
    %v296 = vld [vmem:[#allocation5 + $0x588] sm:$0xff]
    %v297 = vld [vmem:[#allocation5 + $0x590] sm:$0xff]
    %v298 = vld [vmem:[#allocation5 + $0x598] sm:$0xff]
    %v299 = vld [vmem:[#allocation5 + $0x5a0] sm:$0xff]
    %v300 = vld [vmem:[#allocation5 + $0x5a8] sm:$0xff]
    %v301 = vld [vmem:[#allocation5 + $0x5b0] sm:$0xff]
    %v302 = vld [vmem:[#allocation5 + $0x5b8] sm:$0xff]
    %v303 = vld [vmem:[#allocation5 + $0x5c0] sm:$0xff]
    %v304 = vld [vmem:[#allocation5 + $0x5c8] sm:$0xff]
    %v305 = vld [vmem:[#allocation5 + $0x5d0] sm:$0xff]
    %v306 = vld [vmem:[#allocation5 + $0x5d8] sm:$0xff]
    %v307 = vld [vmem:[#allocation5 + $0x5e0] sm:$0xff]
    %v308 = vld [vmem:[#allocation5 + $0x5e8] sm:$0xff]
    %v309 = vld [vmem:[#allocation5 + $0x5f0] sm:$0xff]
    %v310 = vld [vmem:[#allocation5 + $0x5f8] sm:$0xff]
    %v311 = vld [vmem:[#allocation5 + $0x600] sm:$0xff]
    %v312 = vld [vmem:[#allocation5 + $0x608] sm:$0xff]
    %v313 = vld [vmem:[#allocation5 + $0x610] sm:$0xff]
    %v314 = vld [vmem:[#allocation5 + $0x618] sm:$0xff]
    %v315 = vld [vmem:[#allocation5 + $0x620] sm:$0xff]
    %v316 = vld [vmem:[#allocation5 + $0x628] sm:$0xff]
    %v317 = vld [vmem:[#allocation5 + $0x630] sm:$0xff]
    %v318 = vld [vmem:[#allocation5 + $0x638] sm:$0xff]
    %v319 = vld [vmem:[#allocation5 + $0x640] sm:$0xff]
    %v320 = vld [vmem:[#allocation5 + $0x648] sm:$0xff]
    %v321 = vld [vmem:[#allocation5 + $0x650] sm:$0xff]
    %v322 = vld [vmem:[#allocation5 + $0x658] sm:$0xff]
    %v323 = vld [vmem:[#allocation5 + $0x660] sm:$0xff]
    %v324 = vld [vmem:[#allocation5 + $0x668] sm:$0xff]
    %v325 = vld [vmem:[#allocation5 + $0x670] sm:$0xff]
    %v326 = vld [vmem:[#allocation5 + $0x678] sm:$0xff]
    %v327 = vld [vmem:[#allocation5 + $0x680] sm:$0xff]
    %v328 = vld [vmem:[#allocation5 + $0x688] sm:$0xff]
    %v329 = vld [vmem:[#allocation5 + $0x690] sm:$0xff]
    %v330 = vld [vmem:[#allocation5 + $0x698] sm:$0xff]
    %v331 = vld [vmem:[#allocation5 + $0x6a0] sm:$0xff]
    %v332 = vld [vmem:[#allocation5 + $0x6a8] sm:$0xff]
    %v333 = vld [vmem:[#allocation5 + $0x6b0] sm:$0xff]
    %v334 = vld [vmem:[#allocation5 + $0x6b8] sm:$0xff]
    %v335 = vld [vmem:[#allocation5 + $0x6c0] sm:$0xff]
    %v336 = vld [vmem:[#allocation5 + $0x6c8] sm:$0xff]
    %v337 = vld [vmem:[#allocation5 + $0x6d0] sm:$0xff]
    %v338 = vld [vmem:[#allocation5 + $0x6d8] sm:$0xff]
    %v339 = vld [vmem:[#allocation5 + $0x6e0] sm:$0xff]
    %v340 = vld [vmem:[#allocation5 + $0x6e8] sm:$0xff]
    %v341 = vld [vmem:[#allocation5 + $0x6f0] sm:$0xff]
    %v342 = vld [vmem:[#allocation5 + $0x6f8] sm:$0xff]
    %v343 = vld [vmem:[#allocation5 + $0x700] sm:$0xff]
    %v344 = vld [vmem:[#allocation5 + $0x708] sm:$0xff]
    %v345 = vld [vmem:[#allocation5 + $0x710] sm:$0xff]
    %v346 = vld [vmem:[#allocation5 + $0x718] sm:$0xff]
    %v347 = vld [vmem:[#allocation5 + $0x720] sm:$0xff]
    %v348 = vld [vmem:[#allocation5 + $0x728] sm:$0xff]
    %v349 = vld [vmem:[#allocation5 + $0x730] sm:$0xff]
    %v350 = vld [vmem:[#allocation5 + $0x738] sm:$0xff]
    %v351 = vld [vmem:[#allocation5 + $0x740] sm:$0xff]
    %v352 = vld [vmem:[#allocation5 + $0x748] sm:$0xff]
    %v353 = vld [vmem:[#allocation5 + $0x750] sm:$0xff]
    %v354 = vld [vmem:[#allocation5 + $0x758] sm:$0xff]
    %v355 = vld [vmem:[#allocation5 + $0x760] sm:$0xff]
    %v356 = vld [vmem:[#allocation5 + $0x768] sm:$0xff]
    %v357 = vld [vmem:[#allocation5 + $0x770] sm:$0xff]
    %v358 = vld [vmem:[#allocation5 + $0x778] sm:$0xff]
    %v359 = vld [vmem:[#allocation5 + $0x780] sm:$0xff]
    %v360 = vld [vmem:[#allocation5 + $0x788] sm:$0xff]
    %v361 = vld [vmem:[#allocation5 + $0x790] sm:$0xff]
    %v362 = vld [vmem:[#allocation5 + $0x798] sm:$0xff]
    %v363 = vld [vmem:[#allocation5 + $0x7a0] sm:$0xff]
    %v364 = vld [vmem:[#allocation5 + $0x7a8] sm:$0xff]
    %v365 = vld [vmem:[#allocation5 + $0x7b0] sm:$0xff]
    %v366 = vld [vmem:[#allocation5 + $0x7b8] sm:$0xff]
    %v367 = vld [vmem:[#allocation5 + $0x7c0] sm:$0xff]
    %v368 = vld [vmem:[#allocation5 + $0x7c8] sm:$0xff]
    %v369 = vld [vmem:[#allocation5 + $0x7d0] sm:$0xff]
    %v370 = vld [vmem:[#allocation5 + $0x7d8] sm:$0xff]
    %v371 = vld [vmem:[#allocation5 + $0x7e0] sm:$0xff]
    %v372 = vld [vmem:[#allocation5 + $0x7e8] sm:$0xff]
    %v373 = vld [vmem:[#allocation5 + $0x7f0] sm:$0xff]
    %v374 = vld [vmem:[#allocation5 + $0x7f8] sm:$0xff]
    %v375 = vld [vmem:[#allocation5 + $0x800] sm:$0xff]
    %v376 = vld [vmem:[#allocation5 + $0x808] sm:$0xff]
    %v377 = vld [vmem:[#allocation5 + $0x810] sm:$0xff]
    %v378 = vld [vmem:[#allocation5 + $0x818] sm:$0xff]
    %v379 = vld [vmem:[#allocation5 + $0x820] sm:$0xff]
    %v380 = vld [vmem:[#allocation5 + $0x828] sm:$0xff]
    %v381 = vld [vmem:[#allocation5 + $0x830] sm:$0xff]
    %v382 = vld [vmem:[#allocation5 + $0x838] sm:$0xff]
    %v383 = vld [vmem:[#allocation5 + $0x840] sm:$0xff]
    %v384 = vld [vmem:[#allocation5 + $0x848] sm:$0xff]
    %v385 = vld [vmem:[#allocation5 + $0x850] sm:$0xff]
    %v386 = vld [vmem:[#allocation5 + $0x858] sm:$0xff]
    %v387 = vld [vmem:[#allocation5 + $0x860] sm:$0xff]
    %v388 = vld [vmem:[#allocation5 + $0x868] sm:$0xff]
    %v389 = vld [vmem:[#allocation5 + $0x870] sm:$0xff]
    %v390 = vld [vmem:[#allocation5 + $0x878] sm:$0xff]
    %v391 = vld [vmem:[#allocation5 + $0x880] sm:$0xff]
    %v392 = vld [vmem:[#allocation5 + $0x888] sm:$0xff]
    %v393 = vld [vmem:[#allocation5 + $0x890] sm:$0xff]
    %v394 = vld [vmem:[#allocation5 + $0x898] sm:$0xff]
    %v395 = vld [vmem:[#allocation5 + $0x8a0] sm:$0xff]
    %v396 = vld [vmem:[#allocation5 + $0x8a8] sm:$0xff]
    %v397 = vld [vmem:[#allocation5 + $0x8b0] sm:$0xff]
    %v398 = vld [vmem:[#allocation5 + $0x8b8] sm:$0xff]
    %v399 = vld [vmem:[#allocation5 + $0x8c0] sm:$0xff]
    %v400 = vld [vmem:[#allocation5 + $0x8c8] sm:$0xff]
    %v401 = vld [vmem:[#allocation5 + $0x8d0] sm:$0xff]
    %v402 = vld [vmem:[#allocation5 + $0x8d8] sm:$0xff]
    %v403 = vld [vmem:[#allocation5 + $0x8e0] sm:$0xff]
    %v404 = vld [vmem:[#allocation5 + $0x8e8] sm:$0xff]
    %v405 = vld [vmem:[#allocation5 + $0x8f0] sm:$0xff]
    %v406 = vld [vmem:[#allocation5 + $0x8f8] sm:$0xff]
    %v407 = vld [vmem:[#allocation7] sm:$0x3f]
    %v409 = vlaneseq
    %v410 = vshrl.u32 %v409, 7
    %v411 = vsub.s32 0, %v410
    %v412 = vrot.slane %v407, %v411
    %v413 = vlaneseq
    %v414 = vshrl.u32 %v413, 7
    %v415 = vsub.s32 1, %v414
    %v416 = vrot.slane %v407, %v415
    %v417 = vlaneseq
    %v418 = vshrl.u32 %v417, 7
    %v419 = vsub.s32 2, %v418
    %v420 = vrot.slane %v407, %v419
    %v421 = vlaneseq
    %v422 = vshrl.u32 %v421, 7
    %v423 = vsub.s32 3, %v422
    %v424 = vrot.slane %v407, %v423
    %v425 = vlaneseq
    %v426 = vshrl.u32 %v425, 7
    %v427 = vsub.s32 4, %v426
    %v428 = vrot.slane %v407, %v427
    %v429 = vlaneseq
    %v430 = vshrl.u32 %v429, 7
    %v431 = vsub.s32 5, %v430
    %v432 = vrot.slane %v407, %v431
    %v457 = vunpack.c.l.b16 %v101
    %v458 = vunpack.c.h.b16 %v101
    %v459 = vunpack.c.l.b16 %v102
    %v460 = vunpack.c.h.b16 %v102
    %v461 = vunpack.c.l.b16 %v103
    %v462 = vunpack.c.h.b16 %v103
    %v463 = vunpack.c.l.b16 %v104
    %v464 = vunpack.c.h.b16 %v104
    %v465 = vunpack.c.l.b16 %v105
    %v466 = vunpack.c.h.b16 %v105
    %v467 = vunpack.c.l.b16 %v106
    %v468 = vunpack.c.h.b16 %v106
    %v469 = vunpack.c.l.b16 %v107
    %v470 = vunpack.c.h.b16 %v107
    %v471 = vunpack.c.l.b16 %v108
    %v472 = vunpack.c.h.b16 %v108
    %v473 = vunpack.c.l.b16 %v109
    %v474 = vunpack.c.h.b16 %v109
    %v475 = vunpack.c.l.b16 %v110
    %v476 = vunpack.c.h.b16 %v110
    %v477 = vunpack.c.l.b16 %v111
    %v478 = vunpack.c.h.b16 %v111
    %v479 = vunpack.c.l.b16 %v112
    %v480 = vunpack.c.h.b16 %v112
    %v481 = vunpack.c.l.b16 %v113
    %v482 = vunpack.c.h.b16 %v113
    %v483 = vunpack.c.l.b16 %v114
    %v484 = vunpack.c.h.b16 %v114
    %v485 = vunpack.c.l.b16 %v115
    %v486 = vunpack.c.h.b16 %v115
    %v487 = vunpack.c.l.b16 %v116
    %v488 = vunpack.c.h.b16 %v116
    %v489 = vunpack.c.l.b16 %v117
    %v490 = vunpack.c.h.b16 %v117
    %v491 = vunpack.c.l.b16 %v118
    %v492 = vunpack.c.h.b16 %v118
    %v493 = vpack.c.b16 %v463, %v457
    %v494 = vpack.c.b16 %v464, %v458
    %v495 = vpack.c.b16 %v465, %v459
    %v496 = vpack.c.b16 %v466, %v460
    %v497 = vpack.c.b16 %v467, %v461
    %v498 = vpack.c.b16 %v468, %v462
    %v499 = vpack.c.b16 %v475, %v469
    %v500 = vpack.c.b16 %v476, %v470
    %v501 = vpack.c.b16 %v477, %v471
    %v502 = vpack.c.b16 %v478, %v472
    %v503 = vpack.c.b16 %v479, %v473
    %v504 = vpack.c.b16 %v480, %v474
    %v505 = vpack.c.b16 %v487, %v481
    %v506 = vpack.c.b16 %v488, %v482
    %v507 = vpack.c.b16 %v489, %v483
    %v508 = vpack.c.b16 %v490, %v484
    %v509 = vpack.c.b16 %v491, %v485
    %v510 = vpack.c.b16 %v492, %v486
    %v817 = vunpack.c.l.b16 %v119
    %v818 = vunpack.c.h.b16 %v119
    %v819 = vunpack.c.l.b16 %v120
    %v820 = vunpack.c.h.b16 %v120
    %v821 = vunpack.c.l.b16 %v121
    %v822 = vunpack.c.h.b16 %v121
    %v823 = vunpack.c.l.b16 %v122
    %v824 = vunpack.c.h.b16 %v122
    %v825 = vunpack.c.l.b16 %v123
    %v826 = vunpack.c.h.b16 %v123
    %v827 = vunpack.c.l.b16 %v124
    %v828 = vunpack.c.h.b16 %v124
    %v829 = vunpack.c.l.b16 %v125
    %v830 = vunpack.c.h.b16 %v125
    %v831 = vunpack.c.l.b16 %v126
    %v832 = vunpack.c.h.b16 %v126
    %v833 = vunpack.c.l.b16 %v127
    %v834 = vunpack.c.h.b16 %v127
    %v835 = vunpack.c.l.b16 %v128
    %v836 = vunpack.c.h.b16 %v128
    %v837 = vunpack.c.l.b16 %v129
    %v838 = vunpack.c.h.b16 %v129
    %v839 = vunpack.c.l.b16 %v130
    %v840 = vunpack.c.h.b16 %v130
    %v841 = vunpack.c.l.b16 %v131
    %v842 = vunpack.c.h.b16 %v131
    %v843 = vunpack.c.l.b16 %v132
    %v844 = vunpack.c.h.b16 %v132
    %v845 = vunpack.c.l.b16 %v133
    %v846 = vunpack.c.h.b16 %v133
    %v847 = vunpack.c.l.b16 %v134
    %v848 = vunpack.c.h.b16 %v134
    %v849 = vunpack.c.l.b16 %v135
    %v850 = vunpack.c.h.b16 %v135
    %v851 = vunpack.c.l.b16 %v136
    %v852 = vunpack.c.h.b16 %v136
    %v853 = vunpack.c.l.b16 %v137
    %v854 = vunpack.c.h.b16 %v137
    %v855 = vunpack.c.l.b16 %v138
    %v856 = vunpack.c.h.b16 %v138
    %v857 = vunpack.c.l.b16 %v139
    %v858 = vunpack.c.h.b16 %v139
    %v859 = vunpack.c.l.b16 %v140
    %v860 = vunpack.c.h.b16 %v140
    %v861 = vunpack.c.l.b16 %v141
    %v862 = vunpack.c.h.b16 %v141
    %v863 = vunpack.c.l.b16 %v142
    %v864 = vunpack.c.h.b16 %v142
    %v865 = vunpack.c.l.b16 %v143
    %v866 = vunpack.c.h.b16 %v143
    %v867 = vunpack.c.l.b16 %v144
    %v868 = vunpack.c.h.b16 %v144
    %v869 = vunpack.c.l.b16 %v145
    %v870 = vunpack.c.h.b16 %v145
    %v871 = vunpack.c.l.b16 %v146
    %v872 = vunpack.c.h.b16 %v146
    %v873 = vunpack.c.l.b16 %v147
    %v874 = vunpack.c.h.b16 %v147
    %v875 = vunpack.c.l.b16 %v148
    %v876 = vunpack.c.h.b16 %v148
    %v877 = vunpack.c.l.b16 %v149
    %v878 = vunpack.c.h.b16 %v149
    %v879 = vunpack.c.l.b16 %v150
    %v880 = vunpack.c.h.b16 %v150
    %v881 = vunpack.c.l.b16 %v151
    %v882 = vunpack.c.h.b16 %v151
    %v883 = vunpack.c.l.b16 %v152
    %v884 = vunpack.c.h.b16 %v152
    %v885 = vunpack.c.l.b16 %v153
    %v886 = vunpack.c.h.b16 %v153
    %v887 = vunpack.c.l.b16 %v154
    %v888 = vunpack.c.h.b16 %v154
    %v889 = vunpack.c.l.b16 %v155
    %v890 = vunpack.c.h.b16 %v155
    %v891 = vunpack.c.l.b16 %v156
    %v892 = vunpack.c.h.b16 %v156
    %v893 = vunpack.c.l.b16 %v157
    %v894 = vunpack.c.h.b16 %v157
    %v895 = vunpack.c.l.b16 %v158
    %v896 = vunpack.c.h.b16 %v158
    %v897 = vunpack.c.l.b16 %v159
    %v898 = vunpack.c.h.b16 %v159
    %v899 = vunpack.c.l.b16 %v160
    %v900 = vunpack.c.h.b16 %v160
    %v901 = vunpack.c.l.b16 %v161
    %v902 = vunpack.c.h.b16 %v161
    %v903 = vunpack.c.l.b16 %v162
    %v904 = vunpack.c.h.b16 %v162
    %v905 = vunpack.c.l.b16 %v163
    %v906 = vunpack.c.h.b16 %v163
    %v907 = vunpack.c.l.b16 %v164
    %v908 = vunpack.c.h.b16 %v164
    %v909 = vunpack.c.l.b16 %v165
    %v910 = vunpack.c.h.b16 %v165
    %v911 = vunpack.c.l.b16 %v166
    %v912 = vunpack.c.h.b16 %v166
    %v913 = vunpack.c.l.b16 %v167
    %v914 = vunpack.c.h.b16 %v167
    %v915 = vunpack.c.l.b16 %v168
    %v916 = vunpack.c.h.b16 %v168
    %v917 = vunpack.c.l.b16 %v169
    %v918 = vunpack.c.h.b16 %v169
    %v919 = vunpack.c.l.b16 %v170
    %v920 = vunpack.c.h.b16 %v170
    %v921 = vunpack.c.l.b16 %v171
    %v922 = vunpack.c.h.b16 %v171
    %v923 = vunpack.c.l.b16 %v172
    %v924 = vunpack.c.h.b16 %v172
    %v925 = vunpack.c.l.b16 %v173
    %v926 = vunpack.c.h.b16 %v173
    %v927 = vunpack.c.l.b16 %v174
    %v928 = vunpack.c.h.b16 %v174
    %v929 = vunpack.c.l.b16 %v175
    %v930 = vunpack.c.h.b16 %v175
    %v931 = vunpack.c.l.b16 %v176
    %v932 = vunpack.c.h.b16 %v176
    %v933 = vunpack.c.l.b16 %v177
    %v934 = vunpack.c.h.b16 %v177
    %v935 = vunpack.c.l.b16 %v178
    %v936 = vunpack.c.h.b16 %v178
    %v937 = vunpack.c.l.b16 %v179
    %v938 = vunpack.c.h.b16 %v179
    %v939 = vunpack.c.l.b16 %v180
    %v940 = vunpack.c.h.b16 %v180
    %v941 = vunpack.c.l.b16 %v181
    %v942 = vunpack.c.h.b16 %v181
    %v943 = vunpack.c.l.b16 %v182
    %v944 = vunpack.c.h.b16 %v182
    %v945 = vunpack.c.l.b16 %v183
    %v946 = vunpack.c.h.b16 %v183
    %v947 = vunpack.c.l.b16 %v184
    %v948 = vunpack.c.h.b16 %v184
    %v949 = vunpack.c.l.b16 %v185
    %v950 = vunpack.c.h.b16 %v185
    %v951 = vunpack.c.l.b16 %v186
    %v952 = vunpack.c.h.b16 %v186
    %v953 = vunpack.c.l.b16 %v187
    %v954 = vunpack.c.h.b16 %v187
    %v955 = vunpack.c.l.b16 %v188
    %v956 = vunpack.c.h.b16 %v188
    %v957 = vunpack.c.l.b16 %v189
    %v958 = vunpack.c.h.b16 %v189
    %v959 = vunpack.c.l.b16 %v190
    %v960 = vunpack.c.h.b16 %v190
    %v961 = vunpack.c.l.b16 %v191
    %v962 = vunpack.c.h.b16 %v191
    %v963 = vunpack.c.l.b16 %v192
    %v964 = vunpack.c.h.b16 %v192
    %v965 = vunpack.c.l.b16 %v193
    %v966 = vunpack.c.h.b16 %v193
    %v967 = vunpack.c.l.b16 %v194
    %v968 = vunpack.c.h.b16 %v194
    %v969 = vunpack.c.l.b16 %v195
    %v970 = vunpack.c.h.b16 %v195
    %v971 = vunpack.c.l.b16 %v196
    %v972 = vunpack.c.h.b16 %v196
    %v973 = vunpack.c.l.b16 %v197
    %v974 = vunpack.c.h.b16 %v197
    %v975 = vunpack.c.l.b16 %v198
    %v976 = vunpack.c.h.b16 %v198
    %v977 = vunpack.c.l.b16 %v199
    %v978 = vunpack.c.h.b16 %v199
    %v979 = vunpack.c.l.b16 %v200
    %v980 = vunpack.c.h.b16 %v200
    %v981 = vunpack.c.l.b16 %v201
    %v982 = vunpack.c.h.b16 %v201
    %v983 = vunpack.c.l.b16 %v202
    %v984 = vunpack.c.h.b16 %v202
    %v985 = vunpack.c.l.b16 %v203
    %v986 = vunpack.c.h.b16 %v203
    %v987 = vunpack.c.l.b16 %v204
    %v988 = vunpack.c.h.b16 %v204
    %v989 = vunpack.c.l.b16 %v205
    %v990 = vunpack.c.h.b16 %v205
    %v991 = vunpack.c.l.b16 %v206
    %v992 = vunpack.c.h.b16 %v206
    %v993 = vunpack.c.l.b16 %v207
    %v994 = vunpack.c.h.b16 %v207
    %v995 = vunpack.c.l.b16 %v208
    %v996 = vunpack.c.h.b16 %v208
    %v997 = vunpack.c.l.b16 %v209
    %v998 = vunpack.c.h.b16 %v209
    %v999 = vunpack.c.l.b16 %v210
    %v1000 = vunpack.c.h.b16 %v210
    %v1001 = vunpack.c.l.b16 %v211
    %v1002 = vunpack.c.h.b16 %v211
    %v1003 = vunpack.c.l.b16 %v212
    %v1004 = vunpack.c.h.b16 %v212
    %v1005 = vunpack.c.l.b16 %v213
    %v1006 = vunpack.c.h.b16 %v213
    %v1007 = vunpack.c.l.b16 %v214
    %v1008 = vunpack.c.h.b16 %v214
    %v1009 = vunpack.c.l.b16 %v215
    %v1010 = vunpack.c.h.b16 %v215
    %v1011 = vunpack.c.l.b16 %v216
    %v1012 = vunpack.c.h.b16 %v216
    %v1013 = vunpack.c.l.b16 %v217
    %v1014 = vunpack.c.h.b16 %v217
    %v1015 = vunpack.c.l.b16 %v218
    %v1016 = vunpack.c.h.b16 %v218
    %v1017 = vunpack.c.l.b16 %v219
    %v1018 = vunpack.c.h.b16 %v219
    %v1019 = vunpack.c.l.b16 %v220
    %v1020 = vunpack.c.h.b16 %v220
    %v1021 = vunpack.c.l.b16 %v221
    %v1022 = vunpack.c.h.b16 %v221
    %v1023 = vunpack.c.l.b16 %v222
    %v1024 = vunpack.c.h.b16 %v222
    %v1025 = vunpack.c.l.b16 %v223
    %v1026 = vunpack.c.h.b16 %v223
    %v1027 = vunpack.c.l.b16 %v224
    %v1028 = vunpack.c.h.b16 %v224
    %v1029 = vunpack.c.l.b16 %v225
    %v1030 = vunpack.c.h.b16 %v225
    %v1031 = vunpack.c.l.b16 %v226
    %v1032 = vunpack.c.h.b16 %v226
    %v1033 = vunpack.c.l.b16 %v227
    %v1034 = vunpack.c.h.b16 %v227
    %v1035 = vunpack.c.l.b16 %v228
    %v1036 = vunpack.c.h.b16 %v228
    %v1037 = vunpack.c.l.b16 %v229
    %v1038 = vunpack.c.h.b16 %v229
    %v1039 = vunpack.c.l.b16 %v230
    %v1040 = vunpack.c.h.b16 %v230
    %v1041 = vunpack.c.l.b16 %v231
    %v1042 = vunpack.c.h.b16 %v231
    %v1043 = vunpack.c.l.b16 %v232
    %v1044 = vunpack.c.h.b16 %v232
    %v1045 = vunpack.c.l.b16 %v233
    %v1046 = vunpack.c.h.b16 %v233
    %v1047 = vunpack.c.l.b16 %v234
    %v1048 = vunpack.c.h.b16 %v234
    %v1049 = vunpack.c.l.b16 %v235
    %v1050 = vunpack.c.h.b16 %v235
    %v1051 = vunpack.c.l.b16 %v236
    %v1052 = vunpack.c.h.b16 %v236
    %v1053 = vunpack.c.l.b16 %v237
    %v1054 = vunpack.c.h.b16 %v237
    %v1055 = vunpack.c.l.b16 %v238
    %v1056 = vunpack.c.h.b16 %v238
    %v1057 = vunpack.c.l.b16 %v239
    %v1058 = vunpack.c.h.b16 %v239
    %v1059 = vunpack.c.l.b16 %v240
    %v1060 = vunpack.c.h.b16 %v240
    %v1061 = vunpack.c.l.b16 %v241
    %v1062 = vunpack.c.h.b16 %v241
    %v1063 = vunpack.c.l.b16 %v242
    %v1064 = vunpack.c.h.b16 %v242
    %v1065 = vunpack.c.l.b16 %v243
    %v1066 = vunpack.c.h.b16 %v243
    %v1067 = vunpack.c.l.b16 %v244
    %v1068 = vunpack.c.h.b16 %v244
    %v1069 = vunpack.c.l.b16 %v245
    %v1070 = vunpack.c.h.b16 %v245
    %v1071 = vunpack.c.l.b16 %v246
    %v1072 = vunpack.c.h.b16 %v246
    %v1073 = vunpack.c.l.b16 %v247
    %v1074 = vunpack.c.h.b16 %v247
    %v1075 = vunpack.c.l.b16 %v248
    %v1076 = vunpack.c.h.b16 %v248
    %v1077 = vunpack.c.l.b16 %v249
    %v1078 = vunpack.c.h.b16 %v249
    %v1079 = vunpack.c.l.b16 %v250
    %v1080 = vunpack.c.h.b16 %v250
    %v1081 = vunpack.c.l.b16 %v251
    %v1082 = vunpack.c.h.b16 %v251
    %v1083 = vunpack.c.l.b16 %v252
    %v1084 = vunpack.c.h.b16 %v252
    %v1085 = vunpack.c.l.b16 %v253
    %v1086 = vunpack.c.h.b16 %v253
    %v1087 = vunpack.c.l.b16 %v254
    %v1088 = vunpack.c.h.b16 %v254
    %v1089 = vunpack.c.l.b16 %v255
    %v1090 = vunpack.c.h.b16 %v255
    %v1091 = vunpack.c.l.b16 %v256
    %v1092 = vunpack.c.h.b16 %v256
    %v1093 = vunpack.c.l.b16 %v257
    %v1094 = vunpack.c.h.b16 %v257
    %v1095 = vunpack.c.l.b16 %v258
    %v1096 = vunpack.c.h.b16 %v258
    %v1097 = vunpack.c.l.b16 %v259
    %v1098 = vunpack.c.h.b16 %v259
    %v1099 = vunpack.c.l.b16 %v260
    %v1100 = vunpack.c.h.b16 %v260
    %v1101 = vunpack.c.l.b16 %v261
    %v1102 = vunpack.c.h.b16 %v261
    %v1103 = vunpack.c.l.b16 %v262
    %v1104 = vunpack.c.h.b16 %v262
    %v1105 = vunpack.c.l.b16 %v263
    %v1106 = vunpack.c.h.b16 %v263
    %v1107 = vunpack.c.l.b16 %v264
    %v1108 = vunpack.c.h.b16 %v264
    %v1109 = vunpack.c.l.b16 %v265
    %v1110 = vunpack.c.h.b16 %v265
    %v1111 = vunpack.c.l.b16 %v266
    %v1112 = vunpack.c.h.b16 %v266
    %v1113 = vunpack.c.l.b16 %v267
    %v1114 = vunpack.c.h.b16 %v267
    %v1115 = vunpack.c.l.b16 %v268
    %v1116 = vunpack.c.h.b16 %v268
    %v1117 = vunpack.c.l.b16 %v269
    %v1118 = vunpack.c.h.b16 %v269
    %v1119 = vunpack.c.l.b16 %v270
    %v1120 = vunpack.c.h.b16 %v270
    %v1121 = vunpack.c.l.b16 %v271
    %v1122 = vunpack.c.h.b16 %v271
    %v1123 = vunpack.c.l.b16 %v272
    %v1124 = vunpack.c.h.b16 %v272
    %v1125 = vunpack.c.l.b16 %v273
    %v1126 = vunpack.c.h.b16 %v273
    %v1127 = vunpack.c.l.b16 %v274
    %v1128 = vunpack.c.h.b16 %v274
    %v1129 = vunpack.c.l.b16 %v275
    %v1130 = vunpack.c.h.b16 %v275
    %v1131 = vunpack.c.l.b16 %v276
    %v1132 = vunpack.c.h.b16 %v276
    %v1133 = vunpack.c.l.b16 %v277
    %v1134 = vunpack.c.h.b16 %v277
    %v1135 = vunpack.c.l.b16 %v278
    %v1136 = vunpack.c.h.b16 %v278
    %v1137 = vunpack.c.l.b16 %v279
    %v1138 = vunpack.c.h.b16 %v279
    %v1139 = vunpack.c.l.b16 %v280
    %v1140 = vunpack.c.h.b16 %v280
    %v1141 = vunpack.c.l.b16 %v281
    %v1142 = vunpack.c.h.b16 %v281
    %v1143 = vunpack.c.l.b16 %v282
    %v1144 = vunpack.c.h.b16 %v282
    %v1145 = vunpack.c.l.b16 %v283
    %v1146 = vunpack.c.h.b16 %v283
    %v1147 = vunpack.c.l.b16 %v284
    %v1148 = vunpack.c.h.b16 %v284
    %v1149 = vunpack.c.l.b16 %v285
    %v1150 = vunpack.c.h.b16 %v285
    %v1151 = vunpack.c.l.b16 %v286
    %v1152 = vunpack.c.h.b16 %v286
    %v1153 = vunpack.c.l.b16 %v287
    %v1154 = vunpack.c.h.b16 %v287
    %v1155 = vunpack.c.l.b16 %v288
    %v1156 = vunpack.c.h.b16 %v288
    %v1157 = vunpack.c.l.b16 %v289
    %v1158 = vunpack.c.h.b16 %v289
    %v1159 = vunpack.c.l.b16 %v290
    %v1160 = vunpack.c.h.b16 %v290
    %v1161 = vunpack.c.l.b16 %v291
    %v1162 = vunpack.c.h.b16 %v291
    %v1163 = vunpack.c.l.b16 %v292
    %v1164 = vunpack.c.h.b16 %v292
    %v1165 = vunpack.c.l.b16 %v293
    %v1166 = vunpack.c.h.b16 %v293
    %v1167 = vunpack.c.l.b16 %v294
    %v1168 = vunpack.c.h.b16 %v294
    %v1169 = vunpack.c.l.b16 %v295
    %v1170 = vunpack.c.h.b16 %v295
    %v1171 = vunpack.c.l.b16 %v296
    %v1172 = vunpack.c.h.b16 %v296
    %v1173 = vunpack.c.l.b16 %v297
    %v1174 = vunpack.c.h.b16 %v297
    %v1175 = vunpack.c.l.b16 %v298
    %v1176 = vunpack.c.h.b16 %v298
    %v1177 = vunpack.c.l.b16 %v299
    %v1178 = vunpack.c.h.b16 %v299
    %v1179 = vunpack.c.l.b16 %v300
    %v1180 = vunpack.c.h.b16 %v300
    %v1181 = vunpack.c.l.b16 %v301
    %v1182 = vunpack.c.h.b16 %v301
    %v1183 = vunpack.c.l.b16 %v302
    %v1184 = vunpack.c.h.b16 %v302
    %v1185 = vunpack.c.l.b16 %v303
    %v1186 = vunpack.c.h.b16 %v303
    %v1187 = vunpack.c.l.b16 %v304
    %v1188 = vunpack.c.h.b16 %v304
    %v1189 = vunpack.c.l.b16 %v305
    %v1190 = vunpack.c.h.b16 %v305
    %v1191 = vunpack.c.l.b16 %v306
    %v1192 = vunpack.c.h.b16 %v306
    %v1193 = vunpack.c.l.b16 %v307
    %v1194 = vunpack.c.h.b16 %v307
    %v1195 = vunpack.c.l.b16 %v308
    %v1196 = vunpack.c.h.b16 %v308
    %v1197 = vunpack.c.l.b16 %v309
    %v1198 = vunpack.c.h.b16 %v309
    %v1199 = vunpack.c.l.b16 %v310
    %v1200 = vunpack.c.h.b16 %v310
    %v1201 = vunpack.c.l.b16 %v311
    %v1202 = vunpack.c.h.b16 %v311
    %v1203 = vunpack.c.l.b16 %v312
    %v1204 = vunpack.c.h.b16 %v312
    %v1205 = vunpack.c.l.b16 %v313
    %v1206 = vunpack.c.h.b16 %v313
    %v1207 = vunpack.c.l.b16 %v314
    %v1208 = vunpack.c.h.b16 %v314
    %v1209 = vunpack.c.l.b16 %v315
    %v1210 = vunpack.c.h.b16 %v315
    %v1211 = vunpack.c.l.b16 %v316
    %v1212 = vunpack.c.h.b16 %v316
    %v1213 = vunpack.c.l.b16 %v317
    %v1214 = vunpack.c.h.b16 %v317
    %v1215 = vunpack.c.l.b16 %v318
    %v1216 = vunpack.c.h.b16 %v318
    %v1217 = vunpack.c.l.b16 %v319
    %v1218 = vunpack.c.h.b16 %v319
    %v1219 = vunpack.c.l.b16 %v320
    %v1220 = vunpack.c.h.b16 %v320
    %v1221 = vunpack.c.l.b16 %v321
    %v1222 = vunpack.c.h.b16 %v321
    %v1223 = vunpack.c.l.b16 %v322
    %v1224 = vunpack.c.h.b16 %v322
    %v1225 = vunpack.c.l.b16 %v323
    %v1226 = vunpack.c.h.b16 %v323
    %v1227 = vunpack.c.l.b16 %v324
    %v1228 = vunpack.c.h.b16 %v324
    %v1229 = vunpack.c.l.b16 %v325
    %v1230 = vunpack.c.h.b16 %v325
    %v1231 = vunpack.c.l.b16 %v326
    %v1232 = vunpack.c.h.b16 %v326
    %v1233 = vunpack.c.l.b16 %v327
    %v1234 = vunpack.c.h.b16 %v327
    %v1235 = vunpack.c.l.b16 %v328
    %v1236 = vunpack.c.h.b16 %v328
    %v1237 = vunpack.c.l.b16 %v329
    %v1238 = vunpack.c.h.b16 %v329
    %v1239 = vunpack.c.l.b16 %v330
    %v1240 = vunpack.c.h.b16 %v330
    %v1241 = vunpack.c.l.b16 %v331
    %v1242 = vunpack.c.h.b16 %v331
    %v1243 = vunpack.c.l.b16 %v332
    %v1244 = vunpack.c.h.b16 %v332
    %v1245 = vunpack.c.l.b16 %v333
    %v1246 = vunpack.c.h.b16 %v333
    %v1247 = vunpack.c.l.b16 %v334
    %v1248 = vunpack.c.h.b16 %v334
    %v1249 = vunpack.c.l.b16 %v335
    %v1250 = vunpack.c.h.b16 %v335
    %v1251 = vunpack.c.l.b16 %v336
    %v1252 = vunpack.c.h.b16 %v336
    %v1253 = vunpack.c.l.b16 %v337
    %v1254 = vunpack.c.h.b16 %v337
    %v1255 = vunpack.c.l.b16 %v338
    %v1256 = vunpack.c.h.b16 %v338
    %v1257 = vunpack.c.l.b16 %v339
    %v1258 = vunpack.c.h.b16 %v339
    %v1259 = vunpack.c.l.b16 %v340
    %v1260 = vunpack.c.h.b16 %v340
    %v1261 = vunpack.c.l.b16 %v341
    %v1262 = vunpack.c.h.b16 %v341
    %v1263 = vunpack.c.l.b16 %v342
    %v1264 = vunpack.c.h.b16 %v342
    %v1265 = vunpack.c.l.b16 %v343
    %v1266 = vunpack.c.h.b16 %v343
    %v1267 = vunpack.c.l.b16 %v344
    %v1268 = vunpack.c.h.b16 %v344
    %v1269 = vunpack.c.l.b16 %v345
    %v1270 = vunpack.c.h.b16 %v345
    %v1271 = vunpack.c.l.b16 %v346
    %v1272 = vunpack.c.h.b16 %v346
    %v1273 = vunpack.c.l.b16 %v347
    %v1274 = vunpack.c.h.b16 %v347
    %v1275 = vunpack.c.l.b16 %v348
    %v1276 = vunpack.c.h.b16 %v348
    %v1277 = vunpack.c.l.b16 %v349
    %v1278 = vunpack.c.h.b16 %v349
    %v1279 = vunpack.c.l.b16 %v350
    %v1280 = vunpack.c.h.b16 %v350
    %v1281 = vunpack.c.l.b16 %v351
    %v1282 = vunpack.c.h.b16 %v351
    %v1283 = vunpack.c.l.b16 %v352
    %v1284 = vunpack.c.h.b16 %v352
    %v1285 = vunpack.c.l.b16 %v353
    %v1286 = vunpack.c.h.b16 %v353
    %v1287 = vunpack.c.l.b16 %v354
    %v1288 = vunpack.c.h.b16 %v354
    %v1289 = vunpack.c.l.b16 %v355
    %v1290 = vunpack.c.h.b16 %v355
    %v1291 = vunpack.c.l.b16 %v356
    %v1292 = vunpack.c.h.b16 %v356
    %v1293 = vunpack.c.l.b16 %v357
    %v1294 = vunpack.c.h.b16 %v357
    %v1295 = vunpack.c.l.b16 %v358
    %v1296 = vunpack.c.h.b16 %v358
    %v1297 = vunpack.c.l.b16 %v359
    %v1298 = vunpack.c.h.b16 %v359
    %v1299 = vunpack.c.l.b16 %v360
    %v1300 = vunpack.c.h.b16 %v360
    %v1301 = vunpack.c.l.b16 %v361
    %v1302 = vunpack.c.h.b16 %v361
    %v1303 = vunpack.c.l.b16 %v362
    %v1304 = vunpack.c.h.b16 %v362
    %v1305 = vunpack.c.l.b16 %v363
    %v1306 = vunpack.c.h.b16 %v363
    %v1307 = vunpack.c.l.b16 %v364
    %v1308 = vunpack.c.h.b16 %v364
    %v1309 = vunpack.c.l.b16 %v365
    %v1310 = vunpack.c.h.b16 %v365
    %v1311 = vunpack.c.l.b16 %v366
    %v1312 = vunpack.c.h.b16 %v366
    %v1313 = vunpack.c.l.b16 %v367
    %v1314 = vunpack.c.h.b16 %v367
    %v1315 = vunpack.c.l.b16 %v368
    %v1316 = vunpack.c.h.b16 %v368
    %v1317 = vunpack.c.l.b16 %v369
    %v1318 = vunpack.c.h.b16 %v369
    %v1319 = vunpack.c.l.b16 %v370
    %v1320 = vunpack.c.h.b16 %v370
    %v1321 = vunpack.c.l.b16 %v371
    %v1322 = vunpack.c.h.b16 %v371
    %v1323 = vunpack.c.l.b16 %v372
    %v1324 = vunpack.c.h.b16 %v372
    %v1325 = vunpack.c.l.b16 %v373
    %v1326 = vunpack.c.h.b16 %v373
    %v1327 = vunpack.c.l.b16 %v374
    %v1328 = vunpack.c.h.b16 %v374
    %v1329 = vunpack.c.l.b16 %v375
    %v1330 = vunpack.c.h.b16 %v375
    %v1331 = vunpack.c.l.b16 %v376
    %v1332 = vunpack.c.h.b16 %v376
    %v1333 = vunpack.c.l.b16 %v377
    %v1334 = vunpack.c.h.b16 %v377
    %v1335 = vunpack.c.l.b16 %v378
    %v1336 = vunpack.c.h.b16 %v378
    %v1337 = vunpack.c.l.b16 %v379
    %v1338 = vunpack.c.h.b16 %v379
    %v1339 = vunpack.c.l.b16 %v380
    %v1340 = vunpack.c.h.b16 %v380
    %v1341 = vunpack.c.l.b16 %v381
    %v1342 = vunpack.c.h.b16 %v381
    %v1343 = vunpack.c.l.b16 %v382
    %v1344 = vunpack.c.h.b16 %v382
    %v1345 = vunpack.c.l.b16 %v383
    %v1346 = vunpack.c.h.b16 %v383
    %v1347 = vunpack.c.l.b16 %v384
    %v1348 = vunpack.c.h.b16 %v384
    %v1349 = vunpack.c.l.b16 %v385
    %v1350 = vunpack.c.h.b16 %v385
    %v1351 = vunpack.c.l.b16 %v386
    %v1352 = vunpack.c.h.b16 %v386
    %v1353 = vunpack.c.l.b16 %v387
    %v1354 = vunpack.c.h.b16 %v387
    %v1355 = vunpack.c.l.b16 %v388
    %v1356 = vunpack.c.h.b16 %v388
    %v1357 = vunpack.c.l.b16 %v389
    %v1358 = vunpack.c.h.b16 %v389
    %v1359 = vunpack.c.l.b16 %v390
    %v1360 = vunpack.c.h.b16 %v390
    %v1361 = vunpack.c.l.b16 %v391
    %v1362 = vunpack.c.h.b16 %v391
    %v1363 = vunpack.c.l.b16 %v392
    %v1364 = vunpack.c.h.b16 %v392
    %v1365 = vunpack.c.l.b16 %v393
    %v1366 = vunpack.c.h.b16 %v393
    %v1367 = vunpack.c.l.b16 %v394
    %v1368 = vunpack.c.h.b16 %v394
    %v1369 = vunpack.c.l.b16 %v395
    %v1370 = vunpack.c.h.b16 %v395
    %v1371 = vunpack.c.l.b16 %v396
    %v1372 = vunpack.c.h.b16 %v396
    %v1373 = vunpack.c.l.b16 %v397
    %v1374 = vunpack.c.h.b16 %v397
    %v1375 = vunpack.c.l.b16 %v398
    %v1376 = vunpack.c.h.b16 %v398
    %v1377 = vunpack.c.l.b16 %v399
    %v1378 = vunpack.c.h.b16 %v399
    %v1379 = vunpack.c.l.b16 %v400
    %v1380 = vunpack.c.h.b16 %v400
    %v1381 = vunpack.c.l.b16 %v401
    %v1382 = vunpack.c.h.b16 %v401
    %v1383 = vunpack.c.l.b16 %v402
    %v1384 = vunpack.c.h.b16 %v402
    %v1385 = vunpack.c.l.b16 %v403
    %v1386 = vunpack.c.h.b16 %v403
    %v1387 = vunpack.c.l.b16 %v404
    %v1388 = vunpack.c.h.b16 %v404
    %v1389 = vunpack.c.l.b16 %v405
    %v1390 = vunpack.c.h.b16 %v405
    %v1391 = vunpack.c.l.b16 %v406
    %v1392 = vunpack.c.h.b16 %v406
    %v1393 = vpack.c.b16 %v823, %v817
    %v1394 = vpack.c.b16 %v824, %v818
    %v1395 = vpack.c.b16 %v825, %v819
    %v1396 = vpack.c.b16 %v826, %v820
    %v1397 = vpack.c.b16 %v827, %v821
    %v1398 = vpack.c.b16 %v828, %v822
    %v1399 = vpack.c.b16 %v835, %v829
    %v1400 = vpack.c.b16 %v836, %v830
    %v1401 = vpack.c.b16 %v837, %v831
    %v1402 = vpack.c.b16 %v838, %v832
    %v1403 = vpack.c.b16 %v839, %v833
    %v1404 = vpack.c.b16 %v840, %v834
    %v1405 = vpack.c.b16 %v847, %v841
    %v1406 = vpack.c.b16 %v848, %v842
    %v1407 = vpack.c.b16 %v849, %v843
    %v1408 = vpack.c.b16 %v850, %v844
    %v1409 = vpack.c.b16 %v851, %v845
    %v1410 = vpack.c.b16 %v852, %v846
    %v1411 = vpack.c.b16 %v859, %v853
    %v1412 = vpack.c.b16 %v860, %v854
    %v1413 = vpack.c.b16 %v861, %v855
    %v1414 = vpack.c.b16 %v862, %v856
    %v1415 = vpack.c.b16 %v863, %v857
    %v1416 = vpack.c.b16 %v864, %v858
    %v1417 = vpack.c.b16 %v871, %v865
    %v1418 = vpack.c.b16 %v872, %v866
    %v1419 = vpack.c.b16 %v873, %v867
    %v1420 = vpack.c.b16 %v874, %v868
    %v1421 = vpack.c.b16 %v875, %v869
    %v1422 = vpack.c.b16 %v876, %v870
    %v1423 = vpack.c.b16 %v883, %v877
    %v1424 = vpack.c.b16 %v884, %v878
    %v1425 = vpack.c.b16 %v885, %v879
    %v1426 = vpack.c.b16 %v886, %v880
    %v1427 = vpack.c.b16 %v887, %v881
    %v1428 = vpack.c.b16 %v888, %v882
    %v1429 = vpack.c.b16 %v895, %v889
    %v1430 = vpack.c.b16 %v896, %v890
    %v1431 = vpack.c.b16 %v897, %v891
    %v1432 = vpack.c.b16 %v898, %v892
    %v1433 = vpack.c.b16 %v899, %v893
    %v1434 = vpack.c.b16 %v900, %v894
    %v1435 = vpack.c.b16 %v907, %v901
    %v1436 = vpack.c.b16 %v908, %v902
    %v1437 = vpack.c.b16 %v909, %v903
    %v1438 = vpack.c.b16 %v910, %v904
    %v1439 = vpack.c.b16 %v911, %v905
    %v1440 = vpack.c.b16 %v912, %v906
    %v1441 = vpack.c.b16 %v919, %v913
    %v1442 = vpack.c.b16 %v920, %v914
    %v1443 = vpack.c.b16 %v921, %v915
    %v1444 = vpack.c.b16 %v922, %v916
    %v1445 = vpack.c.b16 %v923, %v917
    %v1446 = vpack.c.b16 %v924, %v918
    %v1447 = vpack.c.b16 %v931, %v925
    %v1448 = vpack.c.b16 %v932, %v926
    %v1449 = vpack.c.b16 %v933, %v927
    %v1450 = vpack.c.b16 %v934, %v928
    %v1451 = vpack.c.b16 %v935, %v929
    %v1452 = vpack.c.b16 %v936, %v930
    %v1453 = vpack.c.b16 %v943, %v937
    %v1454 = vpack.c.b16 %v944, %v938
    %v1455 = vpack.c.b16 %v945, %v939
    %v1456 = vpack.c.b16 %v946, %v940
    %v1457 = vpack.c.b16 %v947, %v941
    %v1458 = vpack.c.b16 %v948, %v942
    %v1459 = vpack.c.b16 %v955, %v949
    %v1460 = vpack.c.b16 %v956, %v950
    %v1461 = vpack.c.b16 %v957, %v951
    %v1462 = vpack.c.b16 %v958, %v952
    %v1463 = vpack.c.b16 %v959, %v953
    %v1464 = vpack.c.b16 %v960, %v954
    %v1465 = vpack.c.b16 %v967, %v961
    %v1466 = vpack.c.b16 %v968, %v962
    %v1467 = vpack.c.b16 %v969, %v963
    %v1468 = vpack.c.b16 %v970, %v964
    %v1469 = vpack.c.b16 %v971, %v965
    %v1470 = vpack.c.b16 %v972, %v966
    %v1471 = vpack.c.b16 %v979, %v973
    %v1472 = vpack.c.b16 %v980, %v974
    %v1473 = vpack.c.b16 %v981, %v975
    %v1474 = vpack.c.b16 %v982, %v976
    %v1475 = vpack.c.b16 %v983, %v977
    %v1476 = vpack.c.b16 %v984, %v978
    %v1477 = vpack.c.b16 %v991, %v985
    %v1478 = vpack.c.b16 %v992, %v986
    %v1479 = vpack.c.b16 %v993, %v987
    %v1480 = vpack.c.b16 %v994, %v988
    %v1481 = vpack.c.b16 %v995, %v989
    %v1482 = vpack.c.b16 %v996, %v990
    %v1483 = vpack.c.b16 %v1003, %v997
    %v1484 = vpack.c.b16 %v1004, %v998
    %v1485 = vpack.c.b16 %v1005, %v999
    %v1486 = vpack.c.b16 %v1006, %v1000
    %v1487 = vpack.c.b16 %v1007, %v1001
    %v1488 = vpack.c.b16 %v1008, %v1002
    %v1489 = vpack.c.b16 %v1015, %v1009
    %v1490 = vpack.c.b16 %v1016, %v1010
    %v1491 = vpack.c.b16 %v1017, %v1011
    %v1492 = vpack.c.b16 %v1018, %v1012
    %v1493 = vpack.c.b16 %v1019, %v1013
    %v1494 = vpack.c.b16 %v1020, %v1014
    %v1495 = vpack.c.b16 %v1027, %v1021
    %v1496 = vpack.c.b16 %v1028, %v1022
    %v1497 = vpack.c.b16 %v1029, %v1023
    %v1498 = vpack.c.b16 %v1030, %v1024
    %v1499 = vpack.c.b16 %v1031, %v1025
    %v1500 = vpack.c.b16 %v1032, %v1026
    %v1501 = vpack.c.b16 %v1039, %v1033
    %v1502 = vpack.c.b16 %v1040, %v1034
    %v1503 = vpack.c.b16 %v1041, %v1035
    %v1504 = vpack.c.b16 %v1042, %v1036
    %v1505 = vpack.c.b16 %v1043, %v1037
    %v1506 = vpack.c.b16 %v1044, %v1038
    %v1507 = vpack.c.b16 %v1051, %v1045
    %v1508 = vpack.c.b16 %v1052, %v1046
    %v1509 = vpack.c.b16 %v1053, %v1047
    %v1510 = vpack.c.b16 %v1054, %v1048
    %v1511 = vpack.c.b16 %v1055, %v1049
    %v1512 = vpack.c.b16 %v1056, %v1050
    %v1513 = vpack.c.b16 %v1063, %v1057
    %v1514 = vpack.c.b16 %v1064, %v1058
    %v1515 = vpack.c.b16 %v1065, %v1059
    %v1516 = vpack.c.b16 %v1066, %v1060
    %v1517 = vpack.c.b16 %v1067, %v1061
    %v1518 = vpack.c.b16 %v1068, %v1062
    %v1519 = vpack.c.b16 %v1075, %v1069
    %v1520 = vpack.c.b16 %v1076, %v1070
    %v1521 = vpack.c.b16 %v1077, %v1071
    %v1522 = vpack.c.b16 %v1078, %v1072
    %v1523 = vpack.c.b16 %v1079, %v1073
    %v1524 = vpack.c.b16 %v1080, %v1074
    %v1525 = vpack.c.b16 %v1087, %v1081
    %v1526 = vpack.c.b16 %v1088, %v1082
    %v1527 = vpack.c.b16 %v1089, %v1083
    %v1528 = vpack.c.b16 %v1090, %v1084
    %v1529 = vpack.c.b16 %v1091, %v1085
    %v1530 = vpack.c.b16 %v1092, %v1086
    %v1531 = vpack.c.b16 %v1099, %v1093
    %v1532 = vpack.c.b16 %v1100, %v1094
    %v1533 = vpack.c.b16 %v1101, %v1095
    %v1534 = vpack.c.b16 %v1102, %v1096
    %v1535 = vpack.c.b16 %v1103, %v1097
    %v1536 = vpack.c.b16 %v1104, %v1098
    %v1537 = vpack.c.b16 %v1111, %v1105
    %v1538 = vpack.c.b16 %v1112, %v1106
    %v1539 = vpack.c.b16 %v1113, %v1107
    %v1540 = vpack.c.b16 %v1114, %v1108
    %v1541 = vpack.c.b16 %v1115, %v1109
    %v1542 = vpack.c.b16 %v1116, %v1110
    %v1543 = vpack.c.b16 %v1123, %v1117
    %v1544 = vpack.c.b16 %v1124, %v1118
    %v1545 = vpack.c.b16 %v1125, %v1119
    %v1546 = vpack.c.b16 %v1126, %v1120
    %v1547 = vpack.c.b16 %v1127, %v1121
    %v1548 = vpack.c.b16 %v1128, %v1122
    %v1549 = vpack.c.b16 %v1135, %v1129
    %v1550 = vpack.c.b16 %v1136, %v1130
    %v1551 = vpack.c.b16 %v1137, %v1131
    %v1552 = vpack.c.b16 %v1138, %v1132
    %v1553 = vpack.c.b16 %v1139, %v1133
    %v1554 = vpack.c.b16 %v1140, %v1134
    %v1555 = vpack.c.b16 %v1147, %v1141
    %v1556 = vpack.c.b16 %v1148, %v1142
    %v1557 = vpack.c.b16 %v1149, %v1143
    %v1558 = vpack.c.b16 %v1150, %v1144
    %v1559 = vpack.c.b16 %v1151, %v1145
    %v1560 = vpack.c.b16 %v1152, %v1146
    %v1561 = vpack.c.b16 %v1159, %v1153
    %v1562 = vpack.c.b16 %v1160, %v1154
    %v1563 = vpack.c.b16 %v1161, %v1155
    %v1564 = vpack.c.b16 %v1162, %v1156
    %v1565 = vpack.c.b16 %v1163, %v1157
    %v1566 = vpack.c.b16 %v1164, %v1158
    %v1567 = vpack.c.b16 %v1171, %v1165
    %v1568 = vpack.c.b16 %v1172, %v1166
    %v1569 = vpack.c.b16 %v1173, %v1167
    %v1570 = vpack.c.b16 %v1174, %v1168
    %v1571 = vpack.c.b16 %v1175, %v1169
    %v1572 = vpack.c.b16 %v1176, %v1170
    %v1573 = vpack.c.b16 %v1183, %v1177
    %v1574 = vpack.c.b16 %v1184, %v1178
    %v1575 = vpack.c.b16 %v1185, %v1179
    %v1576 = vpack.c.b16 %v1186, %v1180
    %v1577 = vpack.c.b16 %v1187, %v1181
    %v1578 = vpack.c.b16 %v1188, %v1182
    %v1579 = vpack.c.b16 %v1195, %v1189
    %v1580 = vpack.c.b16 %v1196, %v1190
    %v1581 = vpack.c.b16 %v1197, %v1191
    %v1582 = vpack.c.b16 %v1198, %v1192
    %v1583 = vpack.c.b16 %v1199, %v1193
    %v1584 = vpack.c.b16 %v1200, %v1194
    %v1585 = vpack.c.b16 %v1207, %v1201
    %v1586 = vpack.c.b16 %v1208, %v1202
    %v1587 = vpack.c.b16 %v1209, %v1203
    %v1588 = vpack.c.b16 %v1210, %v1204
    %v1589 = vpack.c.b16 %v1211, %v1205
    %v1590 = vpack.c.b16 %v1212, %v1206
    %v1591 = vpack.c.b16 %v1219, %v1213
    %v1592 = vpack.c.b16 %v1220, %v1214
    %v1593 = vpack.c.b16 %v1221, %v1215
    %v1594 = vpack.c.b16 %v1222, %v1216
    %v1595 = vpack.c.b16 %v1223, %v1217
    %v1596 = vpack.c.b16 %v1224, %v1218
    %v1597 = vpack.c.b16 %v1231, %v1225
    %v1598 = vpack.c.b16 %v1232, %v1226
    %v1599 = vpack.c.b16 %v1233, %v1227
    %v1600 = vpack.c.b16 %v1234, %v1228
    %v1601 = vpack.c.b16 %v1235, %v1229
    %v1602 = vpack.c.b16 %v1236, %v1230
    %v1603 = vpack.c.b16 %v1243, %v1237
    %v1604 = vpack.c.b16 %v1244, %v1238
    %v1605 = vpack.c.b16 %v1245, %v1239
    %v1606 = vpack.c.b16 %v1246, %v1240
    %v1607 = vpack.c.b16 %v1247, %v1241
    %v1608 = vpack.c.b16 %v1248, %v1242
    %v1609 = vpack.c.b16 %v1255, %v1249
    %v1610 = vpack.c.b16 %v1256, %v1250
    %v1611 = vpack.c.b16 %v1257, %v1251
    %v1612 = vpack.c.b16 %v1258, %v1252
    %v1613 = vpack.c.b16 %v1259, %v1253
    %v1614 = vpack.c.b16 %v1260, %v1254
    %v1615 = vpack.c.b16 %v1267, %v1261
    %v1616 = vpack.c.b16 %v1268, %v1262
    %v1617 = vpack.c.b16 %v1269, %v1263
    %v1618 = vpack.c.b16 %v1270, %v1264
    %v1619 = vpack.c.b16 %v1271, %v1265
    %v1620 = vpack.c.b16 %v1272, %v1266
    %v1621 = vpack.c.b16 %v1279, %v1273
    %v1622 = vpack.c.b16 %v1280, %v1274
    %v1623 = vpack.c.b16 %v1281, %v1275
    %v1624 = vpack.c.b16 %v1282, %v1276
    %v1625 = vpack.c.b16 %v1283, %v1277
    %v1626 = vpack.c.b16 %v1284, %v1278
    %v1627 = vpack.c.b16 %v1291, %v1285
    %v1628 = vpack.c.b16 %v1292, %v1286
    %v1629 = vpack.c.b16 %v1293, %v1287
    %v1630 = vpack.c.b16 %v1294, %v1288
    %v1631 = vpack.c.b16 %v1295, %v1289
    %v1632 = vpack.c.b16 %v1296, %v1290
    %v1633 = vpack.c.b16 %v1303, %v1297
    %v1634 = vpack.c.b16 %v1304, %v1298
    %v1635 = vpack.c.b16 %v1305, %v1299
    %v1636 = vpack.c.b16 %v1306, %v1300
    %v1637 = vpack.c.b16 %v1307, %v1301
    %v1638 = vpack.c.b16 %v1308, %v1302
    %v1639 = vpack.c.b16 %v1315, %v1309
    %v1640 = vpack.c.b16 %v1316, %v1310
    %v1641 = vpack.c.b16 %v1317, %v1311
    %v1642 = vpack.c.b16 %v1318, %v1312
    %v1643 = vpack.c.b16 %v1319, %v1313
    %v1644 = vpack.c.b16 %v1320, %v1314
    %v1645 = vpack.c.b16 %v1327, %v1321
    %v1646 = vpack.c.b16 %v1328, %v1322
    %v1647 = vpack.c.b16 %v1329, %v1323
    %v1648 = vpack.c.b16 %v1330, %v1324
    %v1649 = vpack.c.b16 %v1331, %v1325
    %v1650 = vpack.c.b16 %v1332, %v1326
    %v1651 = vpack.c.b16 %v1339, %v1333
    %v1652 = vpack.c.b16 %v1340, %v1334
    %v1653 = vpack.c.b16 %v1341, %v1335
    %v1654 = vpack.c.b16 %v1342, %v1336
    %v1655 = vpack.c.b16 %v1343, %v1337
    %v1656 = vpack.c.b16 %v1344, %v1338
    %v1657 = vpack.c.b16 %v1351, %v1345
    %v1658 = vpack.c.b16 %v1352, %v1346
    %v1659 = vpack.c.b16 %v1353, %v1347
    %v1660 = vpack.c.b16 %v1354, %v1348
    %v1661 = vpack.c.b16 %v1355, %v1349
    %v1662 = vpack.c.b16 %v1356, %v1350
    %v1663 = vpack.c.b16 %v1363, %v1357
    %v1664 = vpack.c.b16 %v1364, %v1358
    %v1665 = vpack.c.b16 %v1365, %v1359
    %v1666 = vpack.c.b16 %v1366, %v1360
    %v1667 = vpack.c.b16 %v1367, %v1361
    %v1668 = vpack.c.b16 %v1368, %v1362
    %v1669 = vpack.c.b16 %v1375, %v1369
    %v1670 = vpack.c.b16 %v1376, %v1370
    %v1671 = vpack.c.b16 %v1377, %v1371
    %v1672 = vpack.c.b16 %v1378, %v1372
    %v1673 = vpack.c.b16 %v1379, %v1373
    %v1674 = vpack.c.b16 %v1380, %v1374
    %v1675 = vpack.c.b16 %v1387, %v1381
    %v1676 = vpack.c.b16 %v1388, %v1382
    %v1677 = vpack.c.b16 %v1389, %v1383
    %v1678 = vpack.c.b16 %v1390, %v1384
    %v1679 = vpack.c.b16 %v1391, %v1385
    %v1680 = vpack.c.b16 %v1392, %v1386
    %1969 = vmatprep.subr.bf16.mxu0 %v1436
    %1970 = vmatpush1.bf16.msra.mxu0 %v1435
    %1971 = vmatprep.subr.bf16.mxu0 %v1430
    %1972 = vmatpush1.bf16.msra.mxu0 %v1429
    %1973 = vmatprep.subr.bf16.mxu0 %v1424
    %1974 = vmatpush1.bf16.msra.mxu0 %v1423
    %1975 = vmatprep.subr.bf16.mxu0 %v1418
    %1976 = vmatpush1.bf16.msra.mxu0 %v1417
    %1977 = vmatprep.subr.bf16.mxu0 %v1412
    %1978 = vmatpush1.bf16.msra.mxu0 %v1411
    %1979 = vmatprep.subr.bf16.mxu0 %v1406
    %1980 = vmatpush1.bf16.msra.mxu0 %v1405
    %1981 = vmatprep.subr.bf16.mxu0 %v1400
    %1982 = vmatpush1.bf16.msra.mxu0 %v1399
    %1983 = vmatprep.subr.bf16.mxu0 %v1394
    %1984 = vmatpush1.bf16.msra.mxu0 %v1393
    %1985 = vmatprep.subr.bf16.mxu0 %v1484
    %1986 = vmatpush2.bf16.msra.mxu0 %v1483
    %1987 = vmatprep.subr.bf16.mxu0 %v1478
    %1988 = vmatpush2.bf16.msra.mxu0 %v1477
    %1989 = vmatprep.subr.bf16.mxu0 %v1472
    %1990 = vmatpush2.bf16.msra.mxu0 %v1471
    %1991 = vmatprep.subr.bf16.mxu0 %v1466
    %1992 = vmatpush2.bf16.msra.mxu0 %v1465
    %1993 = vmatprep.subr.bf16.mxu0 %v1460
    %1994 = vmatpush2.bf16.msra.mxu0 %v1459
    %1995 = vmatprep.subr.bf16.mxu0 %v1454
    %1996 = vmatpush2.bf16.msra.mxu0 %v1453
    %1997 = vmatprep.subr.bf16.mxu0 %v1448
    %1998 = vmatpush2.bf16.msra.mxu0 %v1447
    %1999 = vmatprep.subr.bf16.mxu0 %v1442
    %2000 = vmatpush2.bf16.msra.mxu0 %v1441
    %2001 = vmatprep.mubr.bf16.mxu0 %v494
    %2002 = vmatmul.mubr.bf16.gmra.mxu0 %v493
    %v2003 = vpop.f32.mrf.mxu0
    %v2004 = vadd.f32 %v412, %v2003
    %v2005 = vpop.f32.mrf.mxu0
    %v2006 = vadd.f32 %v416, %v2005
    %v2007 = vpop.f32.mrf.mxu0
    %v2008 = vadd.f32 %v412, %v2007
    %v2009 = vpop.f32.mrf.mxu0
    %v2010 = vadd.f32 %v416, %v2009
    %2011 = vmatprep.mubr.bf16.mxu0 %v500
    %2012 = vmatmul.mubr.bf16.gmra.mxu0 %v499
    %v2013 = vpop.f32.mrf.mxu0
    %v2014 = vadd.f32 %v412, %v2013
    %v2015 = vpop.f32.mrf.mxu0
    %v2016 = vadd.f32 %v416, %v2015
    %v2017 = vpop.f32.mrf.mxu0
    %v2018 = vadd.f32 %v412, %v2017
    %v2019 = vpop.f32.mrf.mxu0
    %v2020 = vadd.f32 %v416, %v2019
    %2021 = vmatprep.mubr.bf16.mxu0 %v506
    %2022 = vmatmul.mubr.bf16.gmra.mxu0 %v505
    %v2023 = vpop.f32.mrf.mxu0
    %v2024 = vadd.f32 %v412, %v2023
    %v2025 = vpop.f32.mrf.mxu0
    %v2026 = vadd.f32 %v416, %v2025
    %v2027 = vpop.f32.mrf.mxu0
    %v2028 = vadd.f32 %v412, %v2027
    %v2029 = vpop.f32.mrf.mxu0
    %v2030 = vadd.f32 %v416, %v2029
    %2031 = vdwg.mxu0
    %2032 = vmatprep.subr.bf16.mxu0 %v1532
    %2033 = vmatpush1.bf16.msra.mxu0 %v1531
    %2034 = vmatprep.subr.bf16.mxu0 %v1526
    %2035 = vmatpush1.bf16.msra.mxu0 %v1525
    %2036 = vmatprep.subr.bf16.mxu0 %v1520
    %2037 = vmatpush1.bf16.msra.mxu0 %v1519
    %2038 = vmatprep.subr.bf16.mxu0 %v1514
    %2039 = vmatpush1.bf16.msra.mxu0 %v1513
    %2040 = vmatprep.subr.bf16.mxu0 %v1508
    %2041 = vmatpush1.bf16.msra.mxu0 %v1507
    %2042 = vmatprep.subr.bf16.mxu0 %v1502
    %2043 = vmatpush1.bf16.msra.mxu0 %v1501
    %2044 = vmatprep.subr.bf16.mxu0 %v1496
    %2045 = vmatpush1.bf16.msra.mxu0 %v1495
    %2046 = vmatprep.subr.bf16.mxu0 %v1490
    %2047 = vmatpush1.bf16.msra.mxu0 %v1489
    %2048 = vmatprep.subr.bf16.mxu0 %v1580
    %2049 = vmatpush2.bf16.msra.mxu0 %v1579
    %2050 = vmatprep.subr.bf16.mxu0 %v1574
    %2051 = vmatpush2.bf16.msra.mxu0 %v1573
    %2052 = vmatprep.subr.bf16.mxu0 %v1568
    %2053 = vmatpush2.bf16.msra.mxu0 %v1567
    %2054 = vmatprep.subr.bf16.mxu0 %v1562
    %2055 = vmatpush2.bf16.msra.mxu0 %v1561
    %2056 = vmatprep.subr.bf16.mxu0 %v1556
    %2057 = vmatpush2.bf16.msra.mxu0 %v1555
    %2058 = vmatprep.subr.bf16.mxu0 %v1550
    %2059 = vmatpush2.bf16.msra.mxu0 %v1549
    %2060 = vmatprep.subr.bf16.mxu0 %v1544
    %2061 = vmatpush2.bf16.msra.mxu0 %v1543
    %2062 = vmatprep.subr.bf16.mxu0 %v1538
    %2063 = vmatpush2.bf16.msra.mxu0 %v1537
    %2064 = vmatprep.mubr.bf16.mxu0 %v496
    %2065 = vmatmul.mubr.bf16.gmra.mxu0 %v495
    %v2066 = vpop.f32.mrf.mxu0
    %v2067 = vadd.f32 %v2004, %v2066
    %v2068 = vpop.f32.mrf.mxu0
    %v2069 = vadd.f32 %v2006, %v2068
    %v2070 = vpop.f32.mrf.mxu0
    %v2071 = vadd.f32 %v2008, %v2070
    %v2072 = vpop.f32.mrf.mxu0
    %v2073 = vadd.f32 %v2010, %v2072
    %2074 = vmatprep.mubr.bf16.mxu0 %v502
    %2075 = vmatmul.mubr.bf16.gmra.mxu0 %v501
    %v2076 = vpop.f32.mrf.mxu0
    %v2077 = vadd.f32 %v2014, %v2076
    %v2078 = vpop.f32.mrf.mxu0
    %v2079 = vadd.f32 %v2016, %v2078
    %v2080 = vpop.f32.mrf.mxu0
    %v2081 = vadd.f32 %v2018, %v2080
    %v2082 = vpop.f32.mrf.mxu0
    %v2083 = vadd.f32 %v2020, %v2082
    %2084 = vmatprep.mubr.bf16.mxu0 %v508
    %2085 = vmatmul.mubr.bf16.gmra.mxu0 %v507
    %v2086 = vpop.f32.mrf.mxu0
    %v2087 = vadd.f32 %v2024, %v2086
    %v2088 = vpop.f32.mrf.mxu0
    %v2089 = vadd.f32 %v2026, %v2088
    %v2090 = vpop.f32.mrf.mxu0
    %v2091 = vadd.f32 %v2028, %v2090
    %v2092 = vpop.f32.mrf.mxu0
    %v2093 = vadd.f32 %v2030, %v2092
    %2094 = vdwg.mxu0
    %2095 = vmatprep.subr.bf16.mxu0 %v1628
    %2096 = vmatpush1.bf16.msra.mxu0 %v1627
    %2097 = vmatprep.subr.bf16.mxu0 %v1622
    %2098 = vmatpush1.bf16.msra.mxu0 %v1621
    %2099 = vmatprep.subr.bf16.mxu0 %v1616
    %2100 = vmatpush1.bf16.msra.mxu0 %v1615
    %2101 = vmatprep.subr.bf16.mxu0 %v1610
    %2102 = vmatpush1.bf16.msra.mxu0 %v1609
    %2103 = vmatprep.subr.bf16.mxu0 %v1604
    %2104 = vmatpush1.bf16.msra.mxu0 %v1603
    %2105 = vmatprep.subr.bf16.mxu0 %v1598
    %2106 = vmatpush1.bf16.msra.mxu0 %v1597
    %2107 = vmatprep.subr.bf16.mxu0 %v1592
    %2108 = vmatpush1.bf16.msra.mxu0 %v1591
    %2109 = vmatprep.subr.bf16.mxu0 %v1586
    %2110 = vmatpush1.bf16.msra.mxu0 %v1585
    %2111 = vmatprep.subr.bf16.mxu0 %v1676
    %2112 = vmatpush2.bf16.msra.mxu0 %v1675
    %2113 = vmatprep.subr.bf16.mxu0 %v1670
    %2114 = vmatpush2.bf16.msra.mxu0 %v1669
    %2115 = vmatprep.subr.bf16.mxu0 %v1664
    %2116 = vmatpush2.bf16.msra.mxu0 %v1663
    %2117 = vmatprep.subr.bf16.mxu0 %v1658
    %2118 = vmatpush2.bf16.msra.mxu0 %v1657
    %2119 = vmatprep.subr.bf16.mxu0 %v1652
    %2120 = vmatpush2.bf16.msra.mxu0 %v1651
    %2121 = vmatprep.subr.bf16.mxu0 %v1646
    %2122 = vmatpush2.bf16.msra.mxu0 %v1645
    %2123 = vmatprep.subr.bf16.mxu0 %v1640
    %2124 = vmatpush2.bf16.msra.mxu0 %v1639
    %2125 = vmatprep.subr.bf16.mxu0 %v1634
    %2126 = vmatpush2.bf16.msra.mxu0 %v1633
    %2127 = vmatprep.mubr.bf16.mxu0 %v498
    %2128 = vmatmul.mubr.bf16.gmra.mxu0 %v497
    %v2129 = vpop.f32.mrf.mxu0
    %v2130 = vadd.f32 %v2067, %v2129
    %v2131 = vpop.f32.mrf.mxu0
    %v2132 = vadd.f32 %v2069, %v2131
    %v2133 = vpop.f32.mrf.mxu0
    %v2134 = vadd.f32 %v2071, %v2133
    %v2135 = vpop.f32.mrf.mxu0
    %v2136 = vadd.f32 %v2073, %v2135
    %2137 = vmatprep.mubr.bf16.mxu0 %v504
    %2138 = vmatmul.mubr.bf16.gmra.mxu0 %v503
    %v2139 = vpop.f32.mrf.mxu0
    %v2140 = vadd.f32 %v2077, %v2139
    %v2141 = vpop.f32.mrf.mxu0
    %v2142 = vadd.f32 %v2079, %v2141
    %v2143 = vpop.f32.mrf.mxu0
    %v2144 = vadd.f32 %v2081, %v2143
    %v2145 = vpop.f32.mrf.mxu0
    %v2146 = vadd.f32 %v2083, %v2145
    %2147 = vmatprep.mubr.bf16.mxu0 %v510
    %2148 = vmatmul.mubr.bf16.gmra.mxu0 %v509
    %v2149 = vpop.f32.mrf.mxu0
    %v2150 = vadd.f32 %v2087, %v2149
    %v2151 = vpop.f32.mrf.mxu0
    %v2152 = vadd.f32 %v2089, %v2151
    %v2153 = vpop.f32.mrf.mxu0
    %v2154 = vadd.f32 %v2091, %v2153
    %v2155 = vpop.f32.mrf.mxu0
    %v2156 = vadd.f32 %v2093, %v2155
    %2157 = vdwg.mxu0
    %2158 = vmatprep.subr.bf16.mxu0 %v1438
    %2159 = vmatpush1.bf16.msra.mxu0 %v1437
    %2160 = vmatprep.subr.bf16.mxu0 %v1432
    %2161 = vmatpush1.bf16.msra.mxu0 %v1431
    %2162 = vmatprep.subr.bf16.mxu0 %v1426
    %2163 = vmatpush1.bf16.msra.mxu0 %v1425
    %2164 = vmatprep.subr.bf16.mxu0 %v1420
    %2165 = vmatpush1.bf16.msra.mxu0 %v1419
    %2166 = vmatprep.subr.bf16.mxu0 %v1414
    %2167 = vmatpush1.bf16.msra.mxu0 %v1413
    %2168 = vmatprep.subr.bf16.mxu0 %v1408
    %2169 = vmatpush1.bf16.msra.mxu0 %v1407
    %2170 = vmatprep.subr.bf16.mxu0 %v1402
    %2171 = vmatpush1.bf16.msra.mxu0 %v1401
    %2172 = vmatprep.subr.bf16.mxu0 %v1396
    %2173 = vmatpush1.bf16.msra.mxu0 %v1395
    %2174 = vmatprep.subr.bf16.mxu0 %v1486
    %2175 = vmatpush2.bf16.msra.mxu0 %v1485
    %2176 = vmatprep.subr.bf16.mxu0 %v1480
    %2177 = vmatpush2.bf16.msra.mxu0 %v1479
    %2178 = vmatprep.subr.bf16.mxu0 %v1474
    %2179 = vmatpush2.bf16.msra.mxu0 %v1473
    %2180 = vmatprep.subr.bf16.mxu0 %v1468
    %2181 = vmatpush2.bf16.msra.mxu0 %v1467
    %2182 = vmatprep.subr.bf16.mxu0 %v1462
    %2183 = vmatpush2.bf16.msra.mxu0 %v1461
    %2184 = vmatprep.subr.bf16.mxu0 %v1456
    %2185 = vmatpush2.bf16.msra.mxu0 %v1455
    %2186 = vmatprep.subr.bf16.mxu0 %v1450
    %2187 = vmatpush2.bf16.msra.mxu0 %v1449
    %2188 = vmatprep.subr.bf16.mxu0 %v1444
    %2189 = vmatpush2.bf16.msra.mxu0 %v1443
    %2190 = vmatprep.mubr.bf16.mxu0 %v494
    %2191 = vmatmul.mubr.bf16.gmra.mxu0 %v493
    %v2192 = vpop.f32.mrf.mxu0
    %v2193 = vadd.f32 %v420, %v2192
    %v2194 = vpop.f32.mrf.mxu0
    %v2195 = vadd.f32 %v424, %v2194
    %v2196 = vpop.f32.mrf.mxu0
    %v2197 = vadd.f32 %v420, %v2196
    %v2198 = vpop.f32.mrf.mxu0
    %v2199 = vadd.f32 %v424, %v2198
    %2200 = vmatprep.mubr.bf16.mxu0 %v500
    %2201 = vmatmul.mubr.bf16.gmra.mxu0 %v499
    %v2202 = vpop.f32.mrf.mxu0
    %v2203 = vadd.f32 %v420, %v2202
    %v2204 = vpop.f32.mrf.mxu0
    %v2205 = vadd.f32 %v424, %v2204
    %v2206 = vpop.f32.mrf.mxu0
    %v2207 = vadd.f32 %v420, %v2206
    %v2208 = vpop.f32.mrf.mxu0
    %v2209 = vadd.f32 %v424, %v2208
    %2210 = vmatprep.mubr.bf16.mxu0 %v506
    %2211 = vmatmul.mubr.bf16.gmra.mxu0 %v505
    %v2212 = vpop.f32.mrf.mxu0
    %v2213 = vadd.f32 %v420, %v2212
    %v2214 = vpop.f32.mrf.mxu0
    %v2215 = vadd.f32 %v424, %v2214
    %v2216 = vpop.f32.mrf.mxu0
    %v2217 = vadd.f32 %v420, %v2216
    %v2218 = vpop.f32.mrf.mxu0
    %v2219 = vadd.f32 %v424, %v2218
    %2220 = vdwg.mxu0
    %2221 = vmatprep.subr.bf16.mxu0 %v1534
    %2222 = vmatpush1.bf16.msra.mxu0 %v1533
    %2223 = vmatprep.subr.bf16.mxu0 %v1528
    %2224 = vmatpush1.bf16.msra.mxu0 %v1527
    %2225 = vmatprep.subr.bf16.mxu0 %v1522
    %2226 = vmatpush1.bf16.msra.mxu0 %v1521
    %2227 = vmatprep.subr.bf16.mxu0 %v1516
    %2228 = vmatpush1.bf16.msra.mxu0 %v1515
    %2229 = vmatprep.subr.bf16.mxu0 %v1510
    %2230 = vmatpush1.bf16.msra.mxu0 %v1509
    %2231 = vmatprep.subr.bf16.mxu0 %v1504
    %2232 = vmatpush1.bf16.msra.mxu0 %v1503
    %2233 = vmatprep.subr.bf16.mxu0 %v1498
    %2234 = vmatpush1.bf16.msra.mxu0 %v1497
    %2235 = vmatprep.subr.bf16.mxu0 %v1492
    %2236 = vmatpush1.bf16.msra.mxu0 %v1491
    %2237 = vmatprep.subr.bf16.mxu0 %v1582
    %2238 = vmatpush2.bf16.msra.mxu0 %v1581
    %2239 = vmatprep.subr.bf16.mxu0 %v1576
    %2240 = vmatpush2.bf16.msra.mxu0 %v1575
    %2241 = vmatprep.subr.bf16.mxu0 %v1570
    %2242 = vmatpush2.bf16.msra.mxu0 %v1569
    %2243 = vmatprep.subr.bf16.mxu0 %v1564
    %2244 = vmatpush2.bf16.msra.mxu0 %v1563
    %2245 = vmatprep.subr.bf16.mxu0 %v1558
    %2246 = vmatpush2.bf16.msra.mxu0 %v1557
    %2247 = vmatprep.subr.bf16.mxu0 %v1552
    %2248 = vmatpush2.bf16.msra.mxu0 %v1551
    %2249 = vmatprep.subr.bf16.mxu0 %v1546
    %2250 = vmatpush2.bf16.msra.mxu0 %v1545
    %2251 = vmatprep.subr.bf16.mxu0 %v1540
    %2252 = vmatpush2.bf16.msra.mxu0 %v1539
    %2253 = vmatprep.mubr.bf16.mxu0 %v496
    %2254 = vmatmul.mubr.bf16.gmra.mxu0 %v495
    %v2255 = vpop.f32.mrf.mxu0
    %v2256 = vadd.f32 %v2193, %v2255
    %v2257 = vpop.f32.mrf.mxu0
    %v2258 = vadd.f32 %v2195, %v2257
    %v2259 = vpop.f32.mrf.mxu0
    %v2260 = vadd.f32 %v2197, %v2259
    %v2261 = vpop.f32.mrf.mxu0
    %v2262 = vadd.f32 %v2199, %v2261
    %2263 = vmatprep.mubr.bf16.mxu0 %v502
    %2264 = vmatmul.mubr.bf16.gmra.mxu0 %v501
    %v2265 = vpop.f32.mrf.mxu0
    %v2266 = vadd.f32 %v2203, %v2265
    %v2267 = vpop.f32.mrf.mxu0
    %v2268 = vadd.f32 %v2205, %v2267
    %v2269 = vpop.f32.mrf.mxu0
    %v2270 = vadd.f32 %v2207, %v2269
    %v2271 = vpop.f32.mrf.mxu0
    %v2272 = vadd.f32 %v2209, %v2271
    %2273 = vmatprep.mubr.bf16.mxu0 %v508
    %2274 = vmatmul.mubr.bf16.gmra.mxu0 %v507
    %v2275 = vpop.f32.mrf.mxu0
    %v2276 = vadd.f32 %v2213, %v2275
    %v2277 = vpop.f32.mrf.mxu0
    %v2278 = vadd.f32 %v2215, %v2277
    %v2279 = vpop.f32.mrf.mxu0
    %v2280 = vadd.f32 %v2217, %v2279
    %v2281 = vpop.f32.mrf.mxu0
    %v2282 = vadd.f32 %v2219, %v2281
    %2283 = vdwg.mxu0
    %2284 = vmatprep.subr.bf16.mxu0 %v1630
    %2285 = vmatpush1.bf16.msra.mxu0 %v1629
    %2286 = vmatprep.subr.bf16.mxu0 %v1624
    %2287 = vmatpush1.bf16.msra.mxu0 %v1623
    %2288 = vmatprep.subr.bf16.mxu0 %v1618
    %2289 = vmatpush1.bf16.msra.mxu0 %v1617
    %2290 = vmatprep.subr.bf16.mxu0 %v1612
    %2291 = vmatpush1.bf16.msra.mxu0 %v1611
    %2292 = vmatprep.subr.bf16.mxu0 %v1606
    %2293 = vmatpush1.bf16.msra.mxu0 %v1605
    %2294 = vmatprep.subr.bf16.mxu0 %v1600
    %2295 = vmatpush1.bf16.msra.mxu0 %v1599
    %2296 = vmatprep.subr.bf16.mxu0 %v1594
    %2297 = vmatpush1.bf16.msra.mxu0 %v1593
    %2298 = vmatprep.subr.bf16.mxu0 %v1588
    %2299 = vmatpush1.bf16.msra.mxu0 %v1587
    %2300 = vmatprep.subr.bf16.mxu0 %v1678
    %2301 = vmatpush2.bf16.msra.mxu0 %v1677
    %2302 = vmatprep.subr.bf16.mxu0 %v1672
    %2303 = vmatpush2.bf16.msra.mxu0 %v1671
    %2304 = vmatprep.subr.bf16.mxu0 %v1666
    %2305 = vmatpush2.bf16.msra.mxu0 %v1665
    %2306 = vmatprep.subr.bf16.mxu0 %v1660
    %2307 = vmatpush2.bf16.msra.mxu0 %v1659
    %2308 = vmatprep.subr.bf16.mxu0 %v1654
    %2309 = vmatpush2.bf16.msra.mxu0 %v1653
    %2310 = vmatprep.subr.bf16.mxu0 %v1648
    %2311 = vmatpush2.bf16.msra.mxu0 %v1647
    %2312 = vmatprep.subr.bf16.mxu0 %v1642
    %2313 = vmatpush2.bf16.msra.mxu0 %v1641
    %2314 = vmatprep.subr.bf16.mxu0 %v1636
    %2315 = vmatpush2.bf16.msra.mxu0 %v1635
    %2316 = vmatprep.mubr.bf16.mxu0 %v498
    %2317 = vmatmul.mubr.bf16.gmra.mxu0 %v497
    %v2318 = vpop.f32.mrf.mxu0
    %v2319 = vadd.f32 %v2256, %v2318
    %v2320 = vpop.f32.mrf.mxu0
    %v2321 = vadd.f32 %v2258, %v2320
    %v2322 = vpop.f32.mrf.mxu0
    %v2323 = vadd.f32 %v2260, %v2322
    %v2324 = vpop.f32.mrf.mxu0
    %v2325 = vadd.f32 %v2262, %v2324
    %2326 = vmatprep.mubr.bf16.mxu0 %v504
    %2327 = vmatmul.mubr.bf16.gmra.mxu0 %v503
    %v2328 = vpop.f32.mrf.mxu0
    %v2329 = vadd.f32 %v2266, %v2328
    %v2330 = vpop.f32.mrf.mxu0
    %v2331 = vadd.f32 %v2268, %v2330
    %v2332 = vpop.f32.mrf.mxu0
    %v2333 = vadd.f32 %v2270, %v2332
    %v2334 = vpop.f32.mrf.mxu0
    %v2335 = vadd.f32 %v2272, %v2334
    %2336 = vmatprep.mubr.bf16.mxu0 %v510
    %2337 = vmatmul.mubr.bf16.gmra.mxu0 %v509
    %v2338 = vpop.f32.mrf.mxu0
    %v2339 = vadd.f32 %v2276, %v2338
    %v2340 = vpop.f32.mrf.mxu0
    %v2341 = vadd.f32 %v2278, %v2340
    %v2342 = vpop.f32.mrf.mxu0
    %v2343 = vadd.f32 %v2280, %v2342
    %v2344 = vpop.f32.mrf.mxu0
    %v2345 = vadd.f32 %v2282, %v2344
    %2346 = vdwg.mxu0
    %2347 = vmatprep.subr.bf16.mxu0 %v1440
    %2348 = vmatpush1.bf16.msra.mxu0 %v1439
    %2349 = vmatprep.subr.bf16.mxu0 %v1434
    %2350 = vmatpush1.bf16.msra.mxu0 %v1433
    %2351 = vmatprep.subr.bf16.mxu0 %v1428
    %2352 = vmatpush1.bf16.msra.mxu0 %v1427
    %2353 = vmatprep.subr.bf16.mxu0 %v1422
    %2354 = vmatpush1.bf16.msra.mxu0 %v1421
    %2355 = vmatprep.subr.bf16.mxu0 %v1416
    %2356 = vmatpush1.bf16.msra.mxu0 %v1415
    %2357 = vmatprep.subr.bf16.mxu0 %v1410
    %2358 = vmatpush1.bf16.msra.mxu0 %v1409
    %2359 = vmatprep.subr.bf16.mxu0 %v1404
    %2360 = vmatpush1.bf16.msra.mxu0 %v1403
    %2361 = vmatprep.subr.bf16.mxu0 %v1398
    %2362 = vmatpush1.bf16.msra.mxu0 %v1397
    %2363 = vmatprep.subr.bf16.mxu0 %v1488
    %2364 = vmatpush2.bf16.msra.mxu0 %v1487
    %2365 = vmatprep.subr.bf16.mxu0 %v1482
    %2366 = vmatpush2.bf16.msra.mxu0 %v1481
    %2367 = vmatprep.subr.bf16.mxu0 %v1476
    %2368 = vmatpush2.bf16.msra.mxu0 %v1475
    %2369 = vmatprep.subr.bf16.mxu0 %v1470
    %2370 = vmatpush2.bf16.msra.mxu0 %v1469
    %2371 = vmatprep.subr.bf16.mxu0 %v1464
    %2372 = vmatpush2.bf16.msra.mxu0 %v1463
    %2373 = vmatprep.subr.bf16.mxu0 %v1458
    %2374 = vmatpush2.bf16.msra.mxu0 %v1457
    %2375 = vmatprep.subr.bf16.mxu0 %v1452
    %2376 = vmatpush2.bf16.msra.mxu0 %v1451
    %2377 = vmatprep.subr.bf16.mxu0 %v1446
    %2378 = vmatpush2.bf16.msra.mxu0 %v1445
    %2379 = vmatprep.mubr.bf16.mxu0 %v494
    %2380 = vmatmul.mubr.bf16.gmra.mxu0 %v493
    %v2381 = vpop.f32.mrf.mxu0
    %v2382 = vadd.f32 %v428, %v2381
    %v2383 = vpop.f32.mrf.mxu0
    %v2384 = vadd.f32 %v432, %v2383
    %v2385 = vpop.f32.mrf.mxu0
    %v2386 = vadd.f32 %v428, %v2385
    %v2387 = vpop.f32.mrf.mxu0
    %v2388 = vadd.f32 %v432, %v2387
    %2389 = vmatprep.mubr.bf16.mxu0 %v500
    %2390 = vmatmul.mubr.bf16.gmra.mxu0 %v499
    %v2391 = vpop.f32.mrf.mxu0
    %v2392 = vadd.f32 %v428, %v2391
    %v2393 = vpop.f32.mrf.mxu0
    %v2394 = vadd.f32 %v432, %v2393
    %v2395 = vpop.f32.mrf.mxu0
    %v2396 = vadd.f32 %v428, %v2395
    %v2397 = vpop.f32.mrf.mxu0
    %v2398 = vadd.f32 %v432, %v2397
    %2399 = vmatprep.mubr.bf16.mxu0 %v506
    %2400 = vmatmul.mubr.bf16.gmra.mxu0 %v505
    %v2401 = vpop.f32.mrf.mxu0
    %v2402 = vadd.f32 %v428, %v2401
    %v2403 = vpop.f32.mrf.mxu0
    %v2404 = vadd.f32 %v432, %v2403
    %v2405 = vpop.f32.mrf.mxu0
    %v2406 = vadd.f32 %v428, %v2405
    %v2407 = vpop.f32.mrf.mxu0
    %v2408 = vadd.f32 %v432, %v2407
    %2409 = vdwg.mxu0
    %2410 = vmatprep.subr.bf16.mxu0 %v1536
    %2411 = vmatpush1.bf16.msra.mxu0 %v1535
    %2412 = vmatprep.subr.bf16.mxu0 %v1530
    %2413 = vmatpush1.bf16.msra.mxu0 %v1529
    %2414 = vmatprep.subr.bf16.mxu0 %v1524
    %2415 = vmatpush1.bf16.msra.mxu0 %v1523
    %2416 = vmatprep.subr.bf16.mxu0 %v1518
    %2417 = vmatpush1.bf16.msra.mxu0 %v1517
    %2418 = vmatprep.subr.bf16.mxu0 %v1512
    %2419 = vmatpush1.bf16.msra.mxu0 %v1511
    %2420 = vmatprep.subr.bf16.mxu0 %v1506
    %2421 = vmatpush1.bf16.msra.mxu0 %v1505
    %2422 = vmatprep.subr.bf16.mxu0 %v1500
    %2423 = vmatpush1.bf16.msra.mxu0 %v1499
    %2424 = vmatprep.subr.bf16.mxu0 %v1494
    %2425 = vmatpush1.bf16.msra.mxu0 %v1493
    %2426 = vmatprep.subr.bf16.mxu0 %v1584
    %2427 = vmatpush2.bf16.msra.mxu0 %v1583
    %2428 = vmatprep.subr.bf16.mxu0 %v1578
    %2429 = vmatpush2.bf16.msra.mxu0 %v1577
    %2430 = vmatprep.subr.bf16.mxu0 %v1572
    %2431 = vmatpush2.bf16.msra.mxu0 %v1571
    %2432 = vmatprep.subr.bf16.mxu0 %v1566
    %2433 = vmatpush2.bf16.msra.mxu0 %v1565
    %2434 = vmatprep.subr.bf16.mxu0 %v1560
    %2435 = vmatpush2.bf16.msra.mxu0 %v1559
    %2436 = vmatprep.subr.bf16.mxu0 %v1554
    %2437 = vmatpush2.bf16.msra.mxu0 %v1553
    %2438 = vmatprep.subr.bf16.mxu0 %v1548
    %2439 = vmatpush2.bf16.msra.mxu0 %v1547
    %2440 = vmatprep.subr.bf16.mxu0 %v1542
    %2441 = vmatpush2.bf16.msra.mxu0 %v1541
    %2442 = vmatprep.mubr.bf16.mxu0 %v496
    %2443 = vmatmul.mubr.bf16.gmra.mxu0 %v495
    %v2444 = vpop.f32.mrf.mxu0
    %v2445 = vadd.f32 %v2382, %v2444
    %v2446 = vpop.f32.mrf.mxu0
    %v2447 = vadd.f32 %v2384, %v2446
    %v2448 = vpop.f32.mrf.mxu0
    %v2449 = vadd.f32 %v2386, %v2448
    %v2450 = vpop.f32.mrf.mxu0
    %v2451 = vadd.f32 %v2388, %v2450
    %2452 = vmatprep.mubr.bf16.mxu0 %v502
    %2453 = vmatmul.mubr.bf16.gmra.mxu0 %v501
    %v2454 = vpop.f32.mrf.mxu0
    %v2455 = vadd.f32 %v2392, %v2454
    %v2456 = vpop.f32.mrf.mxu0
    %v2457 = vadd.f32 %v2394, %v2456
    %v2458 = vpop.f32.mrf.mxu0
    %v2459 = vadd.f32 %v2396, %v2458
    %v2460 = vpop.f32.mrf.mxu0
    %v2461 = vadd.f32 %v2398, %v2460
    %2462 = vmatprep.mubr.bf16.mxu0 %v508
    %2463 = vmatmul.mubr.bf16.gmra.mxu0 %v507
    %v2464 = vpop.f32.mrf.mxu0
    %v2465 = vadd.f32 %v2402, %v2464
    %v2466 = vpop.f32.mrf.mxu0
    %v2467 = vadd.f32 %v2404, %v2466
    %v2468 = vpop.f32.mrf.mxu0
    %v2469 = vadd.f32 %v2406, %v2468
    %v2470 = vpop.f32.mrf.mxu0
    %v2471 = vadd.f32 %v2408, %v2470
    %2472 = vdwg.mxu0
    %2473 = vmatprep.subr.bf16.mxu0 %v1632
    %2474 = vmatpush1.bf16.msra.mxu0 %v1631
    %2475 = vmatprep.subr.bf16.mxu0 %v1626
    %2476 = vmatpush1.bf16.msra.mxu0 %v1625
    %2477 = vmatprep.subr.bf16.mxu0 %v1620
    %2478 = vmatpush1.bf16.msra.mxu0 %v1619
    %2479 = vmatprep.subr.bf16.mxu0 %v1614
    %2480 = vmatpush1.bf16.msra.mxu0 %v1613
    %2481 = vmatprep.subr.bf16.mxu0 %v1608
    %2482 = vmatpush1.bf16.msra.mxu0 %v1607
    %2483 = vmatprep.subr.bf16.mxu0 %v1602
    %2484 = vmatpush1.bf16.msra.mxu0 %v1601
    %2485 = vmatprep.subr.bf16.mxu0 %v1596
    %2486 = vmatpush1.bf16.msra.mxu0 %v1595
    %2487 = vmatprep.subr.bf16.mxu0 %v1590
    %2488 = vmatpush1.bf16.msra.mxu0 %v1589
    %2489 = vmatprep.subr.bf16.mxu0 %v1680
    %2490 = vmatpush2.bf16.msra.mxu0 %v1679
    %2491 = vmatprep.subr.bf16.mxu0 %v1674
    %2492 = vmatpush2.bf16.msra.mxu0 %v1673
    %2493 = vmatprep.subr.bf16.mxu0 %v1668
    %2494 = vmatpush2.bf16.msra.mxu0 %v1667
    %2495 = vmatprep.subr.bf16.mxu0 %v1662
    %2496 = vmatpush2.bf16.msra.mxu0 %v1661
    %2497 = vmatprep.subr.bf16.mxu0 %v1656
    %2498 = vmatpush2.bf16.msra.mxu0 %v1655
    %2499 = vmatprep.subr.bf16.mxu0 %v1650
    %2500 = vmatpush2.bf16.msra.mxu0 %v1649
    %2501 = vmatprep.subr.bf16.mxu0 %v1644
    %2502 = vmatpush2.bf16.msra.mxu0 %v1643
    %2503 = vmatprep.subr.bf16.mxu0 %v1638
    %2504 = vmatpush2.bf16.msra.mxu0 %v1637
    %2505 = vmatprep.mubr.bf16.mxu0 %v498
    %2506 = vmatmul.mubr.bf16.gmra.mxu0 %v497
    %v2507 = vpop.f32.mrf.mxu0
    %v2508 = vadd.f32 %v2445, %v2507
    %v2509 = vpop.f32.mrf.mxu0
    %v2510 = vadd.f32 %v2447, %v2509
    %v2511 = vpop.f32.mrf.mxu0
    %v2512 = vadd.f32 %v2449, %v2511
    %v2513 = vpop.f32.mrf.mxu0
    %v2514 = vadd.f32 %v2451, %v2513
    %2515 = vmatprep.mubr.bf16.mxu0 %v504
    %2516 = vmatmul.mubr.bf16.gmra.mxu0 %v503
    %v2517 = vpop.f32.mrf.mxu0
    %v2518 = vadd.f32 %v2455, %v2517
    %v2519 = vpop.f32.mrf.mxu0
    %v2520 = vadd.f32 %v2457, %v2519
    %v2521 = vpop.f32.mrf.mxu0
    %v2522 = vadd.f32 %v2459, %v2521
    %v2523 = vpop.f32.mrf.mxu0
    %v2524 = vadd.f32 %v2461, %v2523
    %2525 = vmatprep.mubr.bf16.mxu0 %v510
    %2526 = vmatmul.mubr.bf16.gmra.mxu0 %v509
    %v2527 = vpop.f32.mrf.mxu0
    %v2528 = vadd.f32 %v2465, %v2527
    %v2529 = vpop.f32.mrf.mxu0
    %v2530 = vadd.f32 %v2467, %v2529
    %v2531 = vpop.f32.mrf.mxu0
    %v2532 = vadd.f32 %v2469, %v2531
    %v2533 = vpop.f32.mrf.mxu0
    %v2534 = vadd.f32 %v2471, %v2533
    %2535 = vdwg.mxu0
    %v2536 = vtanh.pop %v2130
    %v2537 = vtanh.pop %v2132
    %v2538 = vtanh.pop %v2319
    %v2539 = vtanh.pop %v2321
    %v2540 = vtanh.pop %v2508
    %v2541 = vtanh.pop %v2510
    %v2542 = vtanh.pop %v2134
    %v2543 = vtanh.pop %v2136
    %v2544 = vtanh.pop %v2323
    %v2545 = vtanh.pop %v2325
    %v2546 = vtanh.pop %v2512
    %v2547 = vtanh.pop %v2514
    %v2548 = vtanh.pop %v2140
    %v2549 = vtanh.pop %v2142
    %v2550 = vtanh.pop %v2329
    %v2551 = vtanh.pop %v2331
    %v2552 = vtanh.pop %v2518
    %v2553 = vtanh.pop %v2520
    %v2554 = vtanh.pop %v2144
    %v2555 = vtanh.pop %v2146
    %v2556 = vtanh.pop %v2333
    %v2557 = vtanh.pop %v2335
    %v2558 = vtanh.pop %v2522
    %v2559 = vtanh.pop %v2524
    %v2560 = vtanh.pop %v2150
    %v2561 = vtanh.pop %v2152
    %v2562 = vtanh.pop %v2339
    %v2563 = vtanh.pop %v2341
    %v2564 = vtanh.pop %v2528
    %v2565 = vtanh.pop %v2530
    %v2566 = vtanh.pop %v2154
    %v2567 = vtanh.pop %v2156
    %v2568 = vtanh.pop %v2343
    %v2569 = vtanh.pop %v2345
    %v2570 = vtanh.pop %v2532
    %v2571 = vtanh.pop %v2534
    %v2572 = vadd.f32 %v2536, %v2548
    %v2573 = vadd.f32 %v2572, %v2560
    %v2574 = vadd.f32 %v2537, %v2549
    %v2575 = vadd.f32 %v2574, %v2561
    %v2576 = vadd.f32 %v2538, %v2550
    %v2577 = vadd.f32 %v2576, %v2562
    %v2578 = vadd.f32 %v2539, %v2551
    %v2579 = vadd.f32 %v2578, %v2563
    %v2580 = vadd.f32 %v2540, %v2552
    %v2581 = vadd.f32 %v2580, %v2564
    %v2582 = vadd.f32 %v2541, %v2553
    %v2583 = vadd.f32 %v2582, %v2565
    %v2584 = vadd.f32 %v2542, %v2554
    %v2585 = vadd.f32 %v2584, %v2566
    %v2586 = vadd.f32 %v2543, %v2555
    %v2587 = vadd.f32 %v2586, %v2567
    %v2588 = vadd.f32 %v2544, %v2556
    %v2589 = vadd.f32 %v2588, %v2568
    %v2590 = vadd.f32 %v2545, %v2557
    %v2591 = vadd.f32 %v2590, %v2569
    %v2592 = vadd.f32 %v2546, %v2558
    %v2593 = vadd.f32 %v2592, %v2570
    %v2594 = vadd.f32 %v2547, %v2559
    %v2595 = vadd.f32 %v2594, %v2571
    %v2596 = vmax.f32 %v2536, %v2548
    %v2597 = vmax.f32 %v2596, %v2560
    %v2598 = vmax.f32 %v2537, %v2549
    %v2599 = vmax.f32 %v2598, %v2561
    %v2600 = vmax.f32 %v2538, %v2550
    %v2601 = vmax.f32 %v2600, %v2562
    %v2602 = vmax.f32 %v2539, %v2551
    %v2603 = vmax.f32 %v2602, %v2563
    %v2604 = vmax.f32 %v2540, %v2552
    %v2605 = vmax.f32 %v2604, %v2564
    %v2606 = vmax.f32 %v2541, %v2553
    %v2607 = vmax.f32 %v2606, %v2565
    %v2608 = vmax.f32 %v2542, %v2554
    %v2609 = vmax.f32 %v2608, %v2566
    %v2610 = vmax.f32 %v2543, %v2555
    %v2611 = vmax.f32 %v2610, %v2567
    %v2612 = vmax.f32 %v2544, %v2556
    %v2613 = vmax.f32 %v2612, %v2568
    %v2614 = vmax.f32 %v2545, %v2557
    %v2615 = vmax.f32 %v2614, %v2569
    %v2616 = vmax.f32 %v2546, %v2558
    %v2617 = vmax.f32 %v2616, %v2570
    %v2618 = vmax.f32 %v2547, %v2559
    %v2619 = vmax.f32 %v2618, %v2571
    %v2620 = vadd.f32 %v2573, %v2575
    %v2621 = vadd.f32 %v2620, %v2577
    %v2622 = vadd.f32 %v2621, %v2579
    %v2623 = vadd.f32 %v2622, %v2581
    %v2624 = vadd.f32 %v2623, %v2583
    %2625 = vadd.xlane.f32.xlu0 %v2624
    %v2626 = vpop.xlane.xlu0 %2625
    %v2627 = vadd.f32 %v2585, %v2587
    %v2628 = vadd.f32 %v2627, %v2589
    %v2629 = vadd.f32 %v2628, %v2591
    %v2630 = vadd.f32 %v2629, %v2593
    %v2631 = vadd.f32 %v2630, %v2595
    %2632 = vadd.xlane.f32.xlu0 %v2631
    %v2633 = vpop.xlane.xlu0 %2632
    %v2634 = vmax.f32 %v2626, 1.0
    %v2635 = vmax.f32 %v2633, 1.0
    %v2636 = vrcp.pop %v2634
    %v2637 = vmul.f32 %v2573, %v2636
    %v2638 = vmul.f32 %v2575, %v2636
    %v2639 = vmul.f32 %v2577, %v2636
    %v2640 = vmul.f32 %v2579, %v2636
    %v2641 = vmul.f32 %v2581, %v2636
    %v2642 = vmul.f32 %v2583, %v2636
    %v2643 = vrcp.pop %v2635
    %v2644 = vmul.f32 %v2585, %v2643
    %v2645 = vmul.f32 %v2587, %v2643
    %v2646 = vmul.f32 %v2589, %v2643
    %v2647 = vmul.f32 %v2591, %v2643
    %v2648 = vmul.f32 %v2593, %v2643
    %v2649 = vmul.f32 %v2595, %v2643
    %v2650 = vadd.f32 %v2637, %v2597
    %v2651 = vadd.f32 %v2638, %v2599
    %v2652 = vadd.f32 %v2639, %v2601
    %v2653 = vadd.f32 %v2640, %v2603
    %v2654 = vadd.f32 %v2641, %v2605
    %v2655 = vadd.f32 %v2642, %v2607
    %v2656 = vadd.f32 %v2644, %v2609
    %v2657 = vadd.f32 %v2645, %v2611
    %v2658 = vadd.f32 %v2646, %v2613
    %v2659 = vadd.f32 %v2647, %v2615
    %v2660 = vadd.f32 %v2648, %v2617
    %v2661 = vadd.f32 %v2649, %v2619
    %v2662 = vadd.f32 %v2650, %v2651
    %v2663 = vadd.f32 %v2662, %v2652
    %v2664 = vadd.f32 %v2663, %v2653
    %v2665 = vadd.f32 %v2664, %v2654
    %v2666 = vadd.f32 %v2665, %v2655
    %2667 = vadd.xlane.f32.xlu0 %v2666
    %v2668 = vpop.xlane.xlu0 %2667
    %v2669 = vadd.f32 %v2656, %v2657
    %v2670 = vadd.f32 %v2669, %v2658
    %v2671 = vadd.f32 %v2670, %v2659
    %v2672 = vadd.f32 %v2671, %v2660
    %v2673 = vadd.f32 %v2672, %v2661
    %2674 = vadd.xlane.f32.xlu0 %v2673
    %v2675 = vpop.xlane.xlu0 %2674
    %v2676 = vrcp.pop 768.0
    %v2677 = vmul.f32 %v2668, %v2676
    %v2678 = vmul.f32 %v2675, %v2676
    %v2679 = vsub.f32 %v2650, %v2677
    %v2680 = vsub.f32 %v2651, %v2677
    %v2681 = vsub.f32 %v2652, %v2677
    %v2682 = vsub.f32 %v2653, %v2677
    %v2683 = vsub.f32 %v2654, %v2677
    %v2684 = vsub.f32 %v2655, %v2677
    %v2685 = vsub.f32 %v2656, %v2678
    %v2686 = vsub.f32 %v2657, %v2678
    %v2687 = vsub.f32 %v2658, %v2678
    %v2688 = vsub.f32 %v2659, %v2678
    %v2689 = vsub.f32 %v2660, %v2678
    %v2690 = vsub.f32 %v2661, %v2678
    %v2691 = vmul.f32 %v2679, %v2679
    %v2692 = vmul.f32 %v2680, %v2680
    %v2693 = vmul.f32 %v2681, %v2681
    %v2694 = vmul.f32 %v2682, %v2682
    %v2695 = vmul.f32 %v2683, %v2683
    %v2696 = vmul.f32 %v2684, %v2684
    %v2697 = vmul.f32 %v2685, %v2685
    %v2698 = vmul.f32 %v2686, %v2686
    %v2699 = vmul.f32 %v2687, %v2687
    %v2700 = vmul.f32 %v2688, %v2688
    %v2701 = vmul.f32 %v2689, %v2689
    %v2702 = vmul.f32 %v2690, %v2690
    %v2703 = vadd.f32 %v2691, %v2692
    %v2704 = vadd.f32 %v2703, %v2693
    %v2705 = vadd.f32 %v2704, %v2694
    %v2706 = vadd.f32 %v2705, %v2695
    %v2707 = vadd.f32 %v2706, %v2696
    %2708 = vadd.xlane.f32.xlu0 %v2707
    %v2709 = vpop.xlane.xlu0 %2708
    %v2710 = vadd.f32 %v2697, %v2698
    %v2711 = vadd.f32 %v2710, %v2699
    %v2712 = vadd.f32 %v2711, %v2700
    %v2713 = vadd.f32 %v2712, %v2701
    %v2714 = vadd.f32 %v2713, %v2702
    %2715 = vadd.xlane.f32.xlu0 %v2714
    %v2716 = vpop.xlane.xlu0 %2715
    %v2717 = vmul.f32 %v2709, %v2676
    %v2718 = vmul.f32 %v2716, %v2676
    %v2719 = vadd.f32 %v2717, 1e-05
    %v2720 = vadd.f32 %v2718, 1e-05
    %v2721 = vrsqrt.pop %v2719
    %v2722 = vrsqrt.pop %v2720
    %v2723 = vmul.f32 %v2679, %v2721
    %v2724 = vmul.f32 %v2680, %v2721
    %v2725 = vmul.f32 %v2681, %v2721
    %v2726 = vmul.f32 %v2682, %v2721
    %v2727 = vmul.f32 %v2683, %v2721
    %v2728 = vmul.f32 %v2684, %v2721
    %v2729 = vmul.f32 %v2685, %v2722
    %v2730 = vmul.f32 %v2686, %v2722
    %v2731 = vmul.f32 %v2687, %v2722
    %v2732 = vmul.f32 %v2688, %v2722
    %v2733 = vmul.f32 %v2689, %v2722
    %v2734 = vmul.f32 %v2690, %v2722
    %v2735 = vld [vmem:[#allocation8] sm:$0x3f]
    %v2737 = vlaneseq
    %v2738 = vshrl.u32 %v2737, 7
    %v2739 = vsub.s32 0, %v2738
    %v2740 = vrot.slane %v2735, %v2739
    %v2741 = vlaneseq
    %v2742 = vshrl.u32 %v2741, 7
    %v2743 = vsub.s32 1, %v2742
    %v2744 = vrot.slane %v2735, %v2743
    %v2745 = vlaneseq
    %v2746 = vshrl.u32 %v2745, 7
    %v2747 = vsub.s32 2, %v2746
    %v2748 = vrot.slane %v2735, %v2747
    %v2749 = vlaneseq
    %v2750 = vshrl.u32 %v2749, 7
    %v2751 = vsub.s32 3, %v2750
    %v2752 = vrot.slane %v2735, %v2751
    %v2753 = vlaneseq
    %v2754 = vshrl.u32 %v2753, 7
    %v2755 = vsub.s32 4, %v2754
    %v2756 = vrot.slane %v2735, %v2755
    %v2757 = vlaneseq
    %v2758 = vshrl.u32 %v2757, 7
    %v2759 = vsub.s32 5, %v2758
    %v2760 = vrot.slane %v2735, %v2759
    %v2767 = vmul.f32 %v2723, %v2740
    %v2768 = vmul.f32 %v2724, %v2744
    %v2769 = vmul.f32 %v2725, %v2748
    %v2770 = vmul.f32 %v2726, %v2752
    %v2771 = vmul.f32 %v2727, %v2756
    %v2772 = vmul.f32 %v2728, %v2760
    %v2773 = vmul.f32 %v2729, %v2740
    %v2774 = vmul.f32 %v2730, %v2744
    %v2775 = vmul.f32 %v2731, %v2748
    %v2776 = vmul.f32 %v2732, %v2752
    %v2777 = vmul.f32 %v2733, %v2756
    %v2778 = vmul.f32 %v2734, %v2760
    %v2779 = vld [vmem:[#allocation10] sm:$0x3f]
    %v2781 = vlaneseq
    %v2782 = vshrl.u32 %v2781, 7
    %v2783 = vsub.s32 0, %v2782
    %v2784 = vrot.slane %v2779, %v2783
    %v2785 = vlaneseq
    %v2786 = vshrl.u32 %v2785, 7
    %v2787 = vsub.s32 1, %v2786
    %v2788 = vrot.slane %v2779, %v2787
    %v2789 = vlaneseq
    %v2790 = vshrl.u32 %v2789, 7
    %v2791 = vsub.s32 2, %v2790
    %v2792 = vrot.slane %v2779, %v2791
    %v2793 = vlaneseq
    %v2794 = vshrl.u32 %v2793, 7
    %v2795 = vsub.s32 3, %v2794
    %v2796 = vrot.slane %v2779, %v2795
    %v2797 = vlaneseq
    %v2798 = vshrl.u32 %v2797, 7
    %v2799 = vsub.s32 4, %v2798
    %v2800 = vrot.slane %v2779, %v2799
    %v2801 = vlaneseq
    %v2802 = vshrl.u32 %v2801, 7
    %v2803 = vsub.s32 5, %v2802
    %v2804 = vrot.slane %v2779, %v2803
    %v2811 = vadd.f32 %v2767, %v2784
    %v2812 = vadd.f32 %v2768, %v2788
    %v2813 = vadd.f32 %v2769, %v2792
    %v2814 = vadd.f32 %v2770, %v2796
    %v2815 = vadd.f32 %v2771, %v2800
    %v2816 = vadd.f32 %v2772, %v2804
    %v2817 = vadd.f32 %v2773, %v2784
    %v2818 = vadd.f32 %v2774, %v2788
    %v2819 = vadd.f32 %v2775, %v2792
    %v2820 = vadd.f32 %v2776, %v2796
    %v2821 = vadd.f32 %v2777, %v2800
    %v2822 = vadd.f32 %v2778, %v2804
    %v2823 = vld [vmem:[#allocation11] sm:$0x3f]
    %v2825 = vlaneseq
    %v2826 = vshrl.u32 %v2825, 7
    %v2827 = vsub.s32 0, %v2826
    %v2828 = vrot.slane %v2823, %v2827
    %v2829 = vlaneseq
    %v2830 = vshrl.u32 %v2829, 7
    %v2831 = vsub.s32 1, %v2830
    %v2832 = vrot.slane %v2823, %v2831
    %v2833 = vlaneseq
    %v2834 = vshrl.u32 %v2833, 7
    %v2835 = vsub.s32 2, %v2834
    %v2836 = vrot.slane %v2823, %v2835
    %v2837 = vlaneseq
    %v2838 = vshrl.u32 %v2837, 7
    %v2839 = vsub.s32 3, %v2838
    %v2840 = vrot.slane %v2823, %v2839
    %v2841 = vlaneseq
    %v2842 = vshrl.u32 %v2841, 7
    %v2843 = vsub.s32 4, %v2842
    %v2844 = vrot.slane %v2823, %v2843
    %v2845 = vlaneseq
    %v2846 = vshrl.u32 %v2845, 7
    %v2847 = vsub.s32 5, %v2846
    %v2848 = vrot.slane %v2823, %v2847
    %v2855 = vmul.f32 %v2811, %v2828
    %v2856 = vmul.f32 %v2812, %v2832
    %v2857 = vmul.f32 %v2813, %v2836
    %v2858 = vmul.f32 %v2814, %v2840
    %v2859 = vmul.f32 %v2815, %v2844
    %v2860 = vmul.f32 %v2816, %v2848
    %v2861 = vmul.f32 %v2817, %v2828
    %v2862 = vmul.f32 %v2818, %v2832
    %v2863 = vmul.f32 %v2819, %v2836
    %v2864 = vmul.f32 %v2820, %v2840
    %v2865 = vmul.f32 %v2821, %v2844
    %v2866 = vmul.f32 %v2822, %v2848
    %v2867 = vadd.f32 %v2855, %v2856
    %v2868 = vadd.f32 %v2867, %v2857
    %v2869 = vadd.f32 %v2868, %v2858
    %v2870 = vadd.f32 %v2869, %v2859
    %v2871 = vadd.f32 %v2870, %v2860
    %2872 = vadd.xlane.f32.xlu0 %v2871
    %v2873 = vpop.xlane.xlu0 %2872
    %v2874 = vadd.f32 %v2861, %v2862
    %v2875 = vadd.f32 %v2874, %v2863
    %v2876 = vadd.f32 %v2875, %v2864
    %v2877 = vadd.f32 %v2876, %v2865
    %v2878 = vadd.f32 %v2877, %v2866
    %2879 = vadd.xlane.f32.xlu0 %v2878
    %v2880 = vpop.xlane.xlu0 %2879
    %s2881 = sld [smem:[#allocation2]]
    %v2882 = vstv %s2881
    %v2883 = vadd.f32 %v2873, %v2882
    %v2884 = vadd.f32 %v2880, %v2882
    %vm2885 = vcmask 7168
    %2886 = vst.msk [vmem:[%s7] sm:$0xff] %vm2885, %v2883
    %2887 = vst.msk [vmem:[%s7 + $0x8] sm:$0xff] %vm2885, %v2884
    // Predicated region
    $region54: #{tpu_custom_call.1} parent=1 // pred_check
      _
    $region55: #{tpu_custom_call.1} parent=1 // pred_check_branch
      %2889 = sbr.rel (0) target = $region57
    $region56: #{tpu_custom_call.1} parent=1 // pred_region
      _
    $region57: #{tpu_custom_call.1} parent=1 // pred_fallthru
      _
    // Predicated region
    $region58: #{tpu_custom_call.1} parent=1 // pred_check
      _
    $region59: #{tpu_custom_call.1} parent=1 // pred_check_branch
      %2891 = sbr.rel (0) target = $region61
    $region60: #{tpu_custom_call.1} parent=1 // pred_region
      _
    $region61: #{tpu_custom_call.1} parent=1 // pred_fallthru
      _
    %2892 = vsyncpa [#allocation4], 1
    %2893 = vsyncpa [#allocation6], 1
    %2894 = vsyncpa [#allocation9], 1
    %2895 = vsyncpa [#allocation12], 1

</llo_original>
